<compile_context>
chip_gen: v5e
topology: v5e:2x2
jax: 0.10.0
libtpu: 0.0.40
codegen_flags: <defaults>
</compile_context>

<pallas_src>
import jax
import jax.numpy as jnp
from jax.experimental import pallas as pl
from jax.experimental.pallas import tpu as pltpu

BN_EPS = 1e-5


# ---------------------------------------------------------------------------
# Host-side constant builders
# ---------------------------------------------------------------------------
def _interp_matrix(n_in, n_out):
    """(n_out, n_in) bilinear resize matrix, align_corners=True (PyTorch Upsample)."""
    if n_in == 1:
        return jnp.ones((n_out, 1), jnp.float32)
    src = jnp.arange(n_out, dtype=jnp.float32) * (n_in - 1) / (n_out - 1)
    lo = jnp.clip(jnp.floor(src), 0.0, n_in - 2)
    frac = (src - lo)[:, None]
    lo = lo[:, None]
    cols = jnp.arange(n_in, dtype=jnp.float32)[None, :]
    return (cols == lo) * (1.0 - frac) + (cols == lo + 1.0) * frac


def _fold_bn(w, b, bn):
    """Fold eval-mode BatchNorm into the conv.

    Returns (Cout, 9*Cin) bf16 weights laid out tap-major / channel-minor (matching
    the in-kernel im2col scratch) and a (Cout, 1) f32 bias.
    """
    cout = w.shape[-1]
    s = bn["gamma"] * jax.lax.rsqrt(bn["var"] + BN_EPS)
    wf = (w * s[None, None, None, :]).transpose(3, 0, 1, 2).reshape(cout, -1)
    bf = (b - bn["mean"]) * s + bn["beta"]
    return wf.astype(jnp.bfloat16), bf.reshape(cout, 1).astype(jnp.float32)


# ---------------------------------------------------------------------------
# Kernel 1: separable bilinear x2 upsample of one channel image (pure 2-D matmuls).
#   x:   (1, 1, H1, W1)
#   mhp: (Hp, H1)  H-interp matrix with the conv zero-pad rows baked in
#   mwp: (W1, Wp)  W-interp matrix with the conv zero-pad columns baked in
#   o:   (1, 1, Hp, Wp)  zero-padded upsampled image, bf16
# ---------------------------------------------------------------------------
def _upsample_pad_kernel(x_ref, mhp_ref, mwp_ref, o_ref):
    t = jnp.dot(x_ref[0, 0], mwp_ref[...], preferred_element_type=jnp.float32)
    u = jnp.dot(mhp_ref[...], t, preferred_element_type=jnp.float32)
    o_ref[0, 0] = u.astype(o_ref.dtype)


# ---------------------------------------------------------------------------
# Kernel 2: fused [3x3 conv + folded-BN bias + ReLU] x 2 on one image.
# Flat padded channel-major layout: activation (C, Hp*Wp), row stride Wp = W+2.
# Conv output position j = h*Wp + w reads input position j + kh*Wp + kw, so every
# tap is a plain lane-shifted slice.  Outputs are produced at Wp stride (2 junk
# columns per row); the junk is masked before re-padding and stripped on the host.
# ---------------------------------------------------------------------------
def _make_double_conv_kernel(c1, c2, cout, wp, flat_len):
    cin = c1 + c2
    offs = [kh * wp + kw for kh in range(3) for kw in range(3)]
    l = flat_len

    def kernel(x2f_ref, x1f_ref, w1_ref, b1_ref, w2_ref, b2_ref, mask_ref,
               o_ref, cols1, act1, cols2):
        # ---- conv1: pack 9 shifted slices of both streams into the im2col scratch
        #      (x2 channels first, upsampled-x1 channels second == torch.cat order).
        x2v = x2f_ref[0]                                   # (C2, Hp*Wp) bf16
        x1v = x1f_ref[0]                                   # (C1, Hp*Wp) bf16
        for k, off in enumerate(offs):
            cols1[k * cin:k * cin + c2, :] = x2v[:, off:off + l]
            cols1[k * cin + c2:(k + 1) * cin, :] = x1v[:, off:off + l]
        y1 = jnp.dot(w1_ref[...], cols1[...], preferred_element_type=jnp.float32)
        y1 = jnp.maximum(y1 + b1_ref[...], 0.0) * mask_ref[...]   # (Cout, L) f32

        # ---- re-pad the conv1 activation into the flat padded layout (shift Wp+1).
        act1[:, 0:wp + 1] = jnp.zeros((cout, wp + 1), act1.dtype)
        act1[:, wp + 1:wp + 1 + l] = y1.astype(act1.dtype)
        act1[:, wp + 1 + l:l + 3 * wp] = jnp.zeros((cout, 2 * wp - 1), act1.dtype)

        # ---- conv2.
        a1v = act1[...]                                    # (Cout, Hp*Wp) bf16
        for k, off in enumerate(offs):
            cols2[k * cout:(k + 1) * cout, :] = a1v[:, off:off + l]
        y2 = jnp.dot(w2_ref[...], cols2[...], preferred_element_type=jnp.float32)
        o_ref[0] = jnp.maximum(y2 + b2_ref[...], 0.0).astype(o_ref.dtype)

    return kernel


# ---------------------------------------------------------------------------
# Forward pass (NCHW in / NCHW out, like PyTorch)
# ---------------------------------------------------------------------------
def up_forward(params, x1, x2):
    """x1: (N, C1, H, W), x2: (N, C2, 2H, 2W) -> (N, out_channels, 2H, 2W)."""
    n, c1, h1, w1 = x1.shape
    n2, c2, h2, w2 = x2.shape
    assert n2 == n and h2 == 2 * h1 and w2 == 2 * w1
    cout = params["b1"].shape[0]
    cin = c1 + c2
    wp, hp = w2 + 2, h2 + 3          # 1 pad col each side; 1 top + 2 bottom pad rows
    l = h2 * wp                      # flat conv-output length (Wp row stride)

    # constants: constant-folded at compile time under jit (no per-call scatter).
    mh = _interp_matrix(h1, h2)                                          # (2H, H)
    mw = _interp_matrix(w1, w2)                                          # (2W, W)
    mhp = jnp.concatenate([jnp.zeros((1, h1), jnp.float32), mh,
                           jnp.zeros((2, h1), jnp.float32)], axis=0)     # (Hp, H)
    mwp = jnp.concatenate([jnp.zeros((w1, 1), jnp.float32), mw.T,
                           jnp.zeros((w1, 1), jnp.float32)], axis=1)     # (W, Wp)
    w1f, b1f = _fold_bn(params["w1"], params["b1"], params["bn1"])
    w2f, b2f = _fold_bn(params["w2"], params["b2"], params["bn2"])
    # 1.0 on the W valid columns of every Wp-stride row, 0.0 on the 2 junk columns.
    mask = (jnp.arange(l, dtype=jnp.int32) % wp < w2).astype(jnp.float32).reshape(1, l)

    # kernel 1: separable bilinear upsample, emitted directly in padded layout (bf16).
    x1up = pl.pallas_call(
        _upsample_pad_kernel,
        out_shape=jax.ShapeDtypeStruct((n, c1, hp, wp), jnp.bfloat16),
        grid=(n, c1),
        in_specs=[pl.BlockSpec((1, 1, h1, w1), lambda i, c: (i, c, 0, 0)),
                  pl.BlockSpec((hp, h1), lambda i, c: (0, 0)),
                  pl.BlockSpec((w1, wp), lambda i, c: (0, 0))],
        out_specs=pl.BlockSpec((1, 1, hp, wp), lambda i, c: (i, c, 0, 0)),
        compiler_params=pltpu.CompilerParams(
            dimension_semantics=("parallel", "parallel")),
    )(x1.astype(jnp.float32), mhp, mwp)

    # flat, zero-padded, bf16 input streams for the fused double conv.
    # TODO(synk): the x2 zero-pad here (and the pad-column strip at the end) could
    # also move in-kernel via boundary-masked loads, saving one HBM pass each.
    x2f = jnp.pad(x2.astype(jnp.bfloat16),
                  ((0, 0), (0, 0), (1, 2), (1, 1))).reshape(n, c2, hp * wp)
    x1f = x1up.reshape(n, c1, hp * wp)

    kernel = _make_double_conv_kernel(c1, c2, cout, wp, l)
    outf = pl.pallas_call(
        kernel,
        out_shape=jax.ShapeDtypeStruct((n, cout, l), jnp.float32),
        grid=(n,),
        in_specs=[pl.BlockSpec((1, c2, hp * wp), lambda i: (i, 0, 0)),
                  pl.BlockSpec((1, c1, hp * wp), lambda i: (i, 0, 0)),
                  pl.BlockSpec((cout, 9 * cin), lambda i: (0, 0)),
                  pl.BlockSpec((cout, 1), lambda i: (0, 0)),
                  pl.BlockSpec((cout, 9 * cout), lambda i: (0, 0)),
                  pl.BlockSpec((cout, 1), lambda i: (0, 0)),
                  pl.BlockSpec((1, l), lambda i: (0, 0))],
        out_specs=pl.BlockSpec((1, cout, l), lambda i: (i, 0, 0)),
        scratch_shapes=[pltpu.VMEM((9 * cin, l), jnp.bfloat16),     # conv1 im2col
                        pltpu.VMEM((cout, hp * wp), jnp.bfloat16),  # padded conv1 act
                        pltpu.VMEM((9 * cout, l), jnp.bfloat16)],   # conv2 im2col
        compiler_params=pltpu.CompilerParams(
            dimension_semantics=("parallel",),
            vmem_limit_bytes=48 * 1024 * 1024),
    )(x2f, x1f, w1f, b1f, w2f, b2f, mask)
    # TODO(synk): for very large H*W / channel counts, tile this grid over output-row
    # blocks with a 1-row halo instead of whole images to bound VMEM on v7x (64 MiB).

    # strip the 2 junk pad columns per row (Wp stride -> W): final NCHW output.
    return outf.reshape(n, cout, h2, wp)[:, :, :, :w2]


# ---------------------------------------------------------------------------
# Pure-JAX reference (f32) and parameter init
# ---------------------------------------------------------------------------
def _reference_forward(params, x1, x2):
    _, _, h1, w1 = x1.shape
    mh = _interp_matrix(h1, 2 * h1)
    mw = _interp_matrix(w1, 2 * w1)
    x1u = jnp.einsum("ih,nchw->nciw", mh, x1)
    x1u = jnp.einsum("jw,nciw->ncij", mw, x1u)
    x = jnp.concatenate([x2, x1u], axis=1)

    def block(x, w, b, bn):
        y = jax.lax.conv_general_dilated(
            x, w, window_strides=(1, 1), padding="SAME",
            dimension_numbers=("NCHW", "HWIO", "NCHW"))
        y = y + b[None, :, None, None]
        s = bn["gamma"] * jax.lax.rsqrt(bn["var"] + BN_EPS)
        y = (y - bn["mean"][None, :, None, None]) * s[None, :, None, None] \
            + bn["beta"][None, :, None, None]
        return jnp.maximum(y, 0.0)

    x = block(x, params["w1"], params["b1"], params["bn1"])
    return block(x, params["w2"], params["b2"], params["bn2"])


def init_params(key, in_channels, out_channels):
    k1, k2 = jax.random.split(key)

    def conv_init(k, cin, cout):
        kw, kb = jax.random.split(k)
        bound = 1.0 / jnp.sqrt(cin * 9.0)
        w = jax.random.uniform(kw, (3, 3, cin, cout), jnp.float32, -bound, bound)
        b = jax.random.uniform(kb, (cout,), jnp.float32, -bound, bound)
        return w, b

    def bn_init(c):
        return dict(gamma=jnp.ones((c,), jnp.float32),
                    beta=jnp.zeros((c,), jnp.float32),
                    mean=jnp.zeros((c,), jnp.float32),
                    var=jnp.ones((c,), jnp.float32))

    w1, b1 = conv_init(k1, in_channels, out_channels)
    w2, b2 = conv_init(k2, out_channels, out_channels)
    return dict(w1=w1, b1=b1, bn1=bn_init(out_channels),
                w2=w2, b2=b2, bn2=bn_init(out_channels))


if __name__ == "__main__":
    key = jax.random.PRNGKey(0)
    kx1, kx2, kp = jax.random.split(key, 3)

    N = 2
    c1, c2 = 4, 4                  # x1 channels, x2 (skip-connection) channels
    in_channels = c1 + c2          # conv1 input channels after the concat
    out_channels = 8
    H = W = 16                     # x1 spatial; x2 is 2H x 2W

    x1 = jax.random.normal(kx1, (N, c1, H, W), jnp.float32)
    x2 = jax.random.normal(kx2, (N, c2, 2 * H, 2 * W), jnp.float32)
    params = init_params(kp, in_channels, out_channels)

    fwd = jax.jit(up_forward)
    out = fwd(params, x1, x2)
    jax.block_until_ready(out)

    assert out.shape == (N, out_channels, 2 * H, 2 * W)
    assert bool(jnp.all(jnp.isfinite(out)))

    # loose check against the f32 XLA reference (kernel matmuls run in bf16).
    ref = _reference_forward(params, x1, x2)
    err = float(jnp.max(jnp.abs(out - ref)))
    assert err < 0.25, f"kernel deviates from reference: max abs err = {err}"
    print("KERNEL_OK")
</pallas_src>

<mosaic_0001>
module attributes {stable_mosaic.version = 11 : i64} {
  func.func @_upsample_pad_kernel(%arg0: i32, %arg1: i32, %arg2: memref<1x1x16x16xf32, #tpu.memory_space<vmem>>, %arg3: memref<35x16xf32, #tpu.memory_space<vmem>>, %arg4: memref<16x34xf32, #tpu.memory_space<vmem>>, %arg5: memref<1x1x35x34xbf16, #tpu.memory_space<vmem>>) attributes {dimension_semantics = [#tpu.dimension_semantics<parallel>, #tpu.dimension_semantics<parallel>], iteration_bounds = array<i64: 2, 4>, scalar_prefetch = 0 : i64, scratch_operands = 0 : i64, tpu.core_type = #tpu.core_type<tc>, window_params = [{transform_indices = @transform_0, window_bounds = array<i64: 1, 1, 16, 16>}, {pipeline_mode = #tpu.pipeline_mode<synchronous>, transform_indices = @transform_1, window_bounds = array<i64: 35, 16>}, {pipeline_mode = #tpu.pipeline_mode<synchronous>, transform_indices = @transform_2, window_bounds = array<i64: 16, 34>}, {transform_indices = @transform_3, window_bounds = array<i64: 1, 1, 35, 34>}]} {
    %c0 = arith.constant 0 : index
    %c0_0 = arith.constant 0 : index
    %c0_1 = arith.constant 0 : index
    %c0_2 = arith.constant 0 : index
    %0 = vector.load %arg2[%c0, %c0_0, %c0_1, %c0_2] : memref<1x1x16x16xf32, #tpu.memory_space<vmem>>, vector<1x1x16x16xf32>
    %1 = vector.shape_cast %0 : vector<1x1x16x16xf32> to vector<16x16xf32>
    %c0_3 = arith.constant 0 : index
    %c0_4 = arith.constant 0 : index
    %2 = vector.load %arg4[%c0_3, %c0_4] : memref<16x34xf32, #tpu.memory_space<vmem>>, vector<16x34xf32>
    %cst = arith.constant dense<0.000000e+00> : vector<16x34xf32>
    %3 = tpu.matmul %1, %2, %cst {dimension_numbers = #tpu.dot_dimension_numbers<[1], [0], [0], [1], [0, 0, 1, 1], [], []>} : vector<16x16xf32>, vector<16x34xf32>, vector<16x34xf32> -> vector<16x34xf32>
    %c0_5 = arith.constant 0 : index
    %c0_6 = arith.constant 0 : index
    %4 = vector.load %arg3[%c0_5, %c0_6] : memref<35x16xf32, #tpu.memory_space<vmem>>, vector<35x16xf32>
    %cst_7 = arith.constant dense<0.000000e+00> : vector<35x34xf32>
    %5 = tpu.matmul %4, %3, %cst_7 {dimension_numbers = #tpu.dot_dimension_numbers<[1], [0], [0], [1], [0, 0, 1, 1], [], []>} : vector<35x16xf32>, vector<16x34xf32>, vector<35x34xf32> -> vector<35x34xf32>
    %6 = arith.truncf %5 : vector<35x34xf32> to vector<35x34xbf16>
    %c0_8 = arith.constant 0 : index
    %c0_9 = arith.constant 0 : index
    %c0_10 = arith.constant 0 : index
    %c0_11 = arith.constant 0 : index
    %7 = vector.load %arg5[%c0_8, %c0_9, %c0_10, %c0_11] : memref<1x1x35x34xbf16, #tpu.memory_space<vmem>>, vector<1x1x35x34xbf16>
    %8 = vector.shape_cast %7 : vector<1x1x35x34xbf16> to vector<35x34xbf16>
    %9 = vector.shape_cast %6 : vector<35x34xbf16> to vector<1x1x35x34xbf16>
    tpu.vector_store %arg5[%c0_8, %c0_9, %c0_10, %c0_11], %9 {strides = array<i32>} : memref<1x1x35x34xbf16, #tpu.memory_space<vmem>>, vector<1x1x35x34xbf16>,
    return
  }
  func.func @transform_0(%arg0: i32, %arg1: i32) -> (i32, i32, i32, i32) {
    %c0_i32 = arith.constant 0 : i32
    %c0_i32_0 = arith.constant 0 : i32
    %c0_i32_1 = arith.constant 0 : i32
    return %arg0, %arg1, %c0_i32, %c0_i32_0 : i32, i32, i32, i32
  }
  func.func @transform_1(%arg0: i32, %arg1: i32) -> (i32, i32) {
    %c0_i32 = arith.constant 0 : i32
    %c0_i32_0 = arith.constant 0 : i32
    %c0_i32_1 = arith.constant 0 : i32
    return %c0_i32, %c0_i32_0 : i32, i32
  }
  func.func @transform_2(%arg0: i32, %arg1: i32) -> (i32, i32) {
    %c0_i32 = arith.constant 0 : i32
    %c0_i32_0 = arith.constant 0 : i32
    %c0_i32_1 = arith.constant 0 : i32
    return %c0_i32, %c0_i32_0 : i32, i32
  }
  func.func @transform_3(%arg0: i32, %arg1: i32) -> (i32, i32, i32, i32) {
    %c0_i32 = arith.constant 0 : i32
    %c0_i32_0 = arith.constant 0 : i32
    %c0_i32_1 = arith.constant 0 : i32
    return %arg0, %arg1, %c0_i32, %c0_i32_0 : i32, i32, i32, i32
  }
}

module attributes {stable_mosaic.version = 11 : i64} {
  func.func @kernel(%arg0: i32, %arg1: memref<1x4x1190xbf16, #tpu.memory_space<vmem>>, %arg2: memref<1x4x1190xbf16, #tpu.memory_space<vmem>>, %arg3: memref<8x72xbf16, #tpu.memory_space<vmem>>, %arg4: memref<8x1xf32, #tpu.memory_space<vmem>>, %arg5: memref<8x72xbf16, #tpu.memory_space<vmem>>, %arg6: memref<8x1xf32, #tpu.memory_space<vmem>>, %arg7: memref<1x1088xf32, #tpu.memory_space<vmem>>, %arg8: memref<1x8x1088xf32, #tpu.memory_space<vmem>>, %arg9: memref<72x1088xbf16, #tpu.memory_space<vmem>>, %arg10: memref<8x1190xbf16, #tpu.memory_space<vmem>>, %arg11: memref<72x1088xbf16, #tpu.memory_space<vmem>>) attributes {dimension_semantics = [#tpu.dimension_semantics<parallel>], iteration_bounds = array<i64: 2>, scalar_prefetch = 0 : i64, scratch_operands = 3 : i64, tpu.core_type = #tpu.core_type<tc>, window_params = [{transform_indices = @transform_0, window_bounds = array<i64: 1, 4, 1190>}, {transform_indices = @transform_1, window_bounds = array<i64: 1, 4, 1190>}, {pipeline_mode = #tpu.pipeline_mode<synchronous>, transform_indices = @transform_2, window_bounds = array<i64: 8, 72>}, {pipeline_mode = #tpu.pipeline_mode<synchronous>, transform_indices = @transform_3, window_bounds = array<i64: 8, 1>}, {pipeline_mode = #tpu.pipeline_mode<synchronous>, transform_indices = @transform_4, window_bounds = array<i64: 8, 72>}, {pipeline_mode = #tpu.pipeline_mode<synchronous>, transform_indices = @transform_5, window_bounds = array<i64: 8, 1>}, {pipeline_mode = #tpu.pipeline_mode<synchronous>, transform_indices = @transform_6, window_bounds = array<i64: 1, 1088>}, {transform_indices = @transform_7, window_bounds = array<i64: 1, 8, 1088>}]} {
    %c0 = arith.constant 0 : index
    %c0_0 = arith.constant 0 : index
    %c0_1 = arith.constant 0 : index
    %0 = vector.load %arg1[%c0, %c0_0, %c0_1] : memref<1x4x1190xbf16, #tpu.memory_space<vmem>>, vector<1x4x1190xbf16>
    %1 = vector.shape_cast %0 : vector<1x4x1190xbf16> to vector<4x1190xbf16>
    %c0_2 = arith.constant 0 : index
    %c0_3 = arith.constant 0 : index
    %c0_4 = arith.constant 0 : index
    %2 = vector.load %arg2[%c0_2, %c0_3, %c0_4] : memref<1x4x1190xbf16, #tpu.memory_space<vmem>>, vector<1x4x1190xbf16>
    %3 = vector.shape_cast %2 : vector<1x4x1190xbf16> to vector<4x1190xbf16>
    %4 = vector.extract_strided_slice %1 {offsets = [0, 0], sizes = [4, 1088], strides = [1, 1]} : vector<4x1190xbf16> to vector<4x1088xbf16>
    %c0_5 = arith.constant 0 : index
    %c0_6 = arith.constant 0 : index
    %5 = vector.load %arg9[%c0_5, %c0_6] : memref<72x1088xbf16, #tpu.memory_space<vmem>>, vector<4x1088xbf16>
    tpu.vector_store %arg9[%c0_5, %c0_6], %4 {strides = array<i32>} : memref<72x1088xbf16, #tpu.memory_space<vmem>>, vector<4x1088xbf16>,
    %6 = vector.extract_strided_slice %3 {offsets = [0, 0], sizes = [4, 1088], strides = [1, 1]} : vector<4x1190xbf16> to vector<4x1088xbf16>
    %c4 = arith.constant 4 : index
    %c0_7 = arith.constant 0 : index
    %7 = vector.load %arg9[%c4, %c0_7] : memref<72x1088xbf16, #tpu.memory_space<vmem>>, vector<4x1088xbf16>
    tpu.vector_store %arg9[%c4, %c0_7], %6 {strides = array<i32>} : memref<72x1088xbf16, #tpu.memory_space<vmem>>, vector<4x1088xbf16>,
    %8 = vector.extract_strided_slice %1 {offsets = [0, 1], sizes = [4, 1088], strides = [1, 1]} : vector<4x1190xbf16> to vector<4x1088xbf16>
    %c8 = arith.constant 8 : index
    %c0_8 = arith.constant 0 : index
    %9 = vector.load %arg9[%c8, %c0_8] : memref<72x1088xbf16, #tpu.memory_space<vmem>>, vector<4x1088xbf16>
    tpu.vector_store %arg9[%c8, %c0_8], %8 {strides = array<i32>} : memref<72x1088xbf16, #tpu.memory_space<vmem>>, vector<4x1088xbf16>,
    %10 = vector.extract_strided_slice %3 {offsets = [0, 1], sizes = [4, 1088], strides = [1, 1]} : vector<4x1190xbf16> to vector<4x1088xbf16>
    %c12 = arith.constant 12 : index
    %c0_9 = arith.constant 0 : index
    %11 = vector.load %arg9[%c12, %c0_9] : memref<72x1088xbf16, #tpu.memory_space<vmem>>, vector<4x1088xbf16>
    tpu.vector_store %arg9[%c12, %c0_9], %10 {strides = array<i32>} : memref<72x1088xbf16, #tpu.memory_space<vmem>>, vector<4x1088xbf16>,
    %12 = vector.extract_strided_slice %1 {offsets = [0, 2], sizes = [4, 1088], strides = [1, 1]} : vector<4x1190xbf16> to vector<4x1088xbf16>
    %c16 = arith.constant 16 : index
    %c0_10 = arith.constant 0 : index
    %13 = vector.load %arg9[%c16, %c0_10] : memref<72x1088xbf16, #tpu.memory_space<vmem>>, vector<4x1088xbf16>
    tpu.vector_store %arg9[%c16, %c0_10], %12 {strides = array<i32>} : memref<72x1088xbf16, #tpu.memory_space<vmem>>, vector<4x1088xbf16>,
    %14 = vector.extract_strided_slice %3 {offsets = [0, 2], sizes = [4, 1088], strides = [1, 1]} : vector<4x1190xbf16> to vector<4x1088xbf16>
    %c20 = arith.constant 20 : index
    %c0_11 = arith.constant 0 : index
    %15 = vector.load %arg9[%c20, %c0_11] : memref<72x1088xbf16, #tpu.memory_space<vmem>>, vector<4x1088xbf16>
    tpu.vector_store %arg9[%c20, %c0_11], %14 {strides = array<i32>} : memref<72x1088xbf16, #tpu.memory_space<vmem>>, vector<4x1088xbf16>,
    %16 = vector.extract_strided_slice %1 {offsets = [0, 34], sizes = [4, 1088], strides = [1, 1]} : vector<4x1190xbf16> to vector<4x1088xbf16>
    %c24 = arith.constant 24 : index
    %c0_12 = arith.constant 0 : index
    %17 = vector.load %arg9[%c24, %c0_12] : memref<72x1088xbf16, #tpu.memory_space<vmem>>, vector<4x1088xbf16>
    tpu.vector_store %arg9[%c24, %c0_12], %16 {strides = array<i32>} : memref<72x1088xbf16, #tpu.memory_space<vmem>>, vector<4x1088xbf16>,
    %18 = vector.extract_strided_slice %3 {offsets = [0, 34], sizes = [4, 1088], strides = [1, 1]} : vector<4x1190xbf16> to vector<4x1088xbf16>
    %c28 = arith.constant 28 : index
    %c0_13 = arith.constant 0 : index
    %19 = vector.load %arg9[%c28, %c0_13] : memref<72x1088xbf16, #tpu.memory_space<vmem>>, vector<4x1088xbf16>
    tpu.vector_store %arg9[%c28, %c0_13], %18 {strides = array<i32>} : memref<72x1088xbf16, #tpu.memory_space<vmem>>, vector<4x1088xbf16>,
    %20 = vector.extract_strided_slice %1 {offsets = [0, 35], sizes = [4, 1088], strides = [1, 1]} : vector<4x1190xbf16> to vector<4x1088xbf16>
    %c32 = arith.constant 32 : index
    %c0_14 = arith.constant 0 : index
    %21 = vector.load %arg9[%c32, %c0_14] : memref<72x1088xbf16, #tpu.memory_space<vmem>>, vector<4x1088xbf16>
    tpu.vector_store %arg9[%c32, %c0_14], %20 {strides = array<i32>} : memref<72x1088xbf16, #tpu.memory_space<vmem>>, vector<4x1088xbf16>,
    %22 = vector.extract_strided_slice %3 {offsets = [0, 35], sizes = [4, 1088], strides = [1, 1]} : vector<4x1190xbf16> to vector<4x1088xbf16>
    %c36 = arith.constant 36 : index
    %c0_15 = arith.constant 0 : index
    %23 = vector.load %arg9[%c36, %c0_15] : memref<72x1088xbf16, #tpu.memory_space<vmem>>, vector<4x1088xbf16>
    tpu.vector_store %arg9[%c36, %c0_15], %22 {strides = array<i32>} : memref<72x1088xbf16, #tpu.memory_space<vmem>>, vector<4x1088xbf16>,
    %24 = vector.extract_strided_slice %1 {offsets = [0, 36], sizes = [4, 1088], strides = [1, 1]} : vector<4x1190xbf16> to vector<4x1088xbf16>
    %c40 = arith.constant 40 : index
    %c0_16 = arith.constant 0 : index
    %25 = vector.load %arg9[%c40, %c0_16] : memref<72x1088xbf16, #tpu.memory_space<vmem>>, vector<4x1088xbf16>
    tpu.vector_store %arg9[%c40, %c0_16], %24 {strides = array<i32>} : memref<72x1088xbf16, #tpu.memory_space<vmem>>, vector<4x1088xbf16>,
    %26 = vector.extract_strided_slice %3 {offsets = [0, 36], sizes = [4, 1088], strides = [1, 1]} : vector<4x1190xbf16> to vector<4x1088xbf16>
    %c44 = arith.constant 44 : index
    %c0_17 = arith.constant 0 : index
    %27 = vector.load %arg9[%c44, %c0_17] : memref<72x1088xbf16, #tpu.memory_space<vmem>>, vector<4x1088xbf16>
    tpu.vector_store %arg9[%c44, %c0_17], %26 {strides = array<i32>} : memref<72x1088xbf16, #tpu.memory_space<vmem>>, vector<4x1088xbf16>,
    %28 = vector.extract_strided_slice %1 {offsets = [0, 68], sizes = [4, 1088], strides = [1, 1]} : vector<4x1190xbf16> to vector<4x1088xbf16>
    %c48 = arith.constant 48 : index
    %c0_18 = arith.constant 0 : index
    %29 = vector.load %arg9[%c48, %c0_18] : memref<72x1088xbf16, #tpu.memory_space<vmem>>, vector<4x1088xbf16>
    tpu.vector_store %arg9[%c48, %c0_18], %28 {strides = array<i32>} : memref<72x1088xbf16, #tpu.memory_space<vmem>>, vector<4x1088xbf16>,
    %30 = vector.extract_strided_slice %3 {offsets = [0, 68], sizes = [4, 1088], strides = [1, 1]} : vector<4x1190xbf16> to vector<4x1088xbf16>
    %c52 = arith.constant 52 : index
    %c0_19 = arith.constant 0 : index
    %31 = vector.load %arg9[%c52, %c0_19] : memref<72x1088xbf16, #tpu.memory_space<vmem>>, vector<4x1088xbf16>
    tpu.vector_store %arg9[%c52, %c0_19], %30 {strides = array<i32>} : memref<72x1088xbf16, #tpu.memory_space<vmem>>, vector<4x1088xbf16>,
    %32 = vector.extract_strided_slice %1 {offsets = [0, 69], sizes = [4, 1088], strides = [1, 1]} : vector<4x1190xbf16> to vector<4x1088xbf16>
    %c56 = arith.constant 56 : index
    %c0_20 = arith.constant 0 : index
    %33 = vector.load %arg9[%c56, %c0_20] : memref<72x1088xbf16, #tpu.memory_space<vmem>>, vector<4x1088xbf16>
    tpu.vector_store %arg9[%c56, %c0_20], %32 {strides = array<i32>} : memref<72x1088xbf16, #tpu.memory_space<vmem>>, vector<4x1088xbf16>,
    %34 = vector.extract_strided_slice %3 {offsets = [0, 69], sizes = [4, 1088], strides = [1, 1]} : vector<4x1190xbf16> to vector<4x1088xbf16>
    %c60 = arith.constant 60 : index
    %c0_21 = arith.constant 0 : index
    %35 = vector.load %arg9[%c60, %c0_21] : memref<72x1088xbf16, #tpu.memory_space<vmem>>, vector<4x1088xbf16>
    tpu.vector_store %arg9[%c60, %c0_21], %34 {strides = array<i32>} : memref<72x1088xbf16, #tpu.memory_space<vmem>>, vector<4x1088xbf16>,
    %36 = vector.extract_strided_slice %1 {offsets = [0, 70], sizes = [4, 1088], strides = [1, 1]} : vector<4x1190xbf16> to vector<4x1088xbf16>
    %c64 = arith.constant 64 : index
    %c0_22 = arith.constant 0 : index
    %37 = vector.load %arg9[%c64, %c0_22] : memref<72x1088xbf16, #tpu.memory_space<vmem>>, vector<4x1088xbf16>
    tpu.vector_store %arg9[%c64, %c0_22], %36 {strides = array<i32>} : memref<72x1088xbf16, #tpu.memory_space<vmem>>, vector<4x1088xbf16>,
    %38 = vector.extract_strided_slice %3 {offsets = [0, 70], sizes = [4, 1088], strides = [1, 1]} : vector<4x1190xbf16> to vector<4x1088xbf16>
    %c68 = arith.constant 68 : index
    %c0_23 = arith.constant 0 : index
    %39 = vector.load %arg9[%c68, %c0_23] : memref<72x1088xbf16, #tpu.memory_space<vmem>>, vector<4x1088xbf16>
    tpu.vector_store %arg9[%c68, %c0_23], %38 {strides = array<i32>} : memref<72x1088xbf16, #tpu.memory_space<vmem>>, vector<4x1088xbf16>,
    %c0_24 = arith.constant 0 : index
    %c0_25 = arith.constant 0 : index
    %40 = vector.load %arg3[%c0_24, %c0_25] : memref<8x72xbf16, #tpu.memory_space<vmem>>, vector<8x72xbf16>
    %c0_26 = arith.constant 0 : index
    %c0_27 = arith.constant 0 : index
    %41 = vector.load %arg9[%c0_26, %c0_27] : memref<72x1088xbf16, #tpu.memory_space<vmem>>, vector<72x1088xbf16>
    %cst = arith.constant dense<0.000000e+00> : vector<8x1088xf32>
    %42 = tpu.matmul %40, %41, %cst {dimension_numbers = #tpu.dot_dimension_numbers<[1], [0], [0], [1], [0, 0, 1, 1], [], []>} : vector<8x72xbf16>, vector<72x1088xbf16>, vector<8x1088xf32> -> vector<8x1088xf32>
    %c0_28 = arith.constant 0 : index
    %c0_29 = arith.constant 0 : index
    %43 = vector.load %arg4[%c0_28, %c0_29] : memref<8x1xf32, #tpu.memory_space<vmem>>, vector<8x1xf32>
    %44 = vector.broadcast %43 : vector<8x1xf32> to vector<8x1088xf32>
    %45 = arith.addf %42, %44 : vector<8x1088xf32>
    %cst_30 = arith.constant 0.000000e+00 : f32
    %46 = vector.broadcast %cst_30 : f32 to vector<8x1088xf32>
    %47 = arith.maximumf %45, %46 : vector<8x1088xf32>
    %c0_31 = arith.constant 0 : index
    %c0_32 = arith.constant 0 : index
    %48 = vector.load %arg7[%c0_31, %c0_32] : memref<1x1088xf32, #tpu.memory_space<vmem>>, vector<1x1088xf32>
    %49 = vector.broadcast %48 : vector<1x1088xf32> to vector<8x1088xf32>
    %50 = arith.mulf %47, %49 : vector<8x1088xf32>
    %cst_33 = arith.constant 0.000000e+00 : bf16
    %51 = vector.broadcast %cst_33 : bf16 to vector<8x35xbf16>
    %c0_34 = arith.constant 0 : index
    %c0_35 = arith.constant 0 : index
    %52 = vector.load %arg10[%c0_34, %c0_35] : memref<8x1190xbf16, #tpu.memory_space<vmem>>, vector<8x35xbf16>
    tpu.vector_store %arg10[%c0_34, %c0_35], %51 {strides = array<i32>} : memref<8x1190xbf16, #tpu.memory_space<vmem>>, vector<8x35xbf16>,
    %53 = arith.truncf %50 : vector<8x1088xf32> to vector<8x1088xbf16>
    %c0_36 = arith.constant 0 : index
    %c35 = arith.constant 35 : index
    %54 = vector.load %arg10[%c0_36, %c35] : memref<8x1190xbf16, #tpu.memory_space<vmem>>, vector<8x1088xbf16>
    tpu.vector_store %arg10[%c0_36, %c35], %53 {strides = array<i32>} : memref<8x1190xbf16, #tpu.memory_space<vmem>>, vector<8x1088xbf16>,
    %cst_37 = arith.constant 0.000000e+00 : bf16
    %55 = vector.broadcast %cst_37 : bf16 to vector<8x67xbf16>
    %c0_38 = arith.constant 0 : index
    %c1123 = arith.constant 1123 : index
    %56 = vector.load %arg10[%c0_38, %c1123] : memref<8x1190xbf16, #tpu.memory_space<vmem>>, vector<8x67xbf16>
    tpu.vector_store %arg10[%c0_38, %c1123], %55 {strides = array<i32>} : memref<8x1190xbf16, #tpu.memory_space<vmem>>, vector<8x67xbf16>,
    %c0_39 = arith.constant 0 : index
    %c0_40 = arith.constant 0 : index
    %57 = vector.load %arg10[%c0_39, %c0_40] : memref<8x1190xbf16, #tpu.memory_space<vmem>>, vector<8x1190xbf16>
    %58 = vector.extract_strided_slice %57 {offsets = [0, 0], sizes = [8, 1088], strides = [1, 1]} : vector<8x1190xbf16> to vector<8x1088xbf16>
    %c0_41 = arith.constant 0 : index
    %c0_42 = arith.constant 0 : index
    %59 = vector.load %arg11[%c0_41, %c0_42] : memref<72x1088xbf16, #tpu.memory_space<vmem>>, vector<8x1088xbf16>
    tpu.vector_store %arg11[%c0_41, %c0_42], %58 {strides = array<i32>} : memref<72x1088xbf16, #tpu.memory_space<vmem>>, vector<8x1088xbf16>,
    %60 = vector.extract_strided_slice %57 {offsets = [0, 1], sizes = [8, 1088], strides = [1, 1]} : vector<8x1190xbf16> to vector<8x1088xbf16>
    %c8_43 = arith.constant 8 : index
    %c0_44 = arith.constant 0 : index
    %61 = vector.load %arg11[%c8_43, %c0_44] : memref<72x1088xbf16, #tpu.memory_space<vmem>>, vector<8x1088xbf16>
    tpu.vector_store %arg11[%c8_43, %c0_44], %60 {strides = array<i32>} : memref<72x1088xbf16, #tpu.memory_space<vmem>>, vector<8x1088xbf16>,
    %62 = vector.extract_strided_slice %57 {offsets = [0, 2], sizes = [8, 1088], strides = [1, 1]} : vector<8x1190xbf16> to vector<8x1088xbf16>
    %c16_45 = arith.constant 16 : index
    %c0_46 = arith.constant 0 : index
    %63 = vector.load %arg11[%c16_45, %c0_46] : memref<72x1088xbf16, #tpu.memory_space<vmem>>, vector<8x1088xbf16>
    tpu.vector_store %arg11[%c16_45, %c0_46], %62 {strides = array<i32>} : memref<72x1088xbf16, #tpu.memory_space<vmem>>, vector<8x1088xbf16>,
    %64 = vector.extract_strided_slice %57 {offsets = [0, 34], sizes = [8, 1088], strides = [1, 1]} : vector<8x1190xbf16> to vector<8x1088xbf16>
    %c24_47 = arith.constant 24 : index
    %c0_48 = arith.constant 0 : index
    %65 = vector.load %arg11[%c24_47, %c0_48] : memref<72x1088xbf16, #tpu.memory_space<vmem>>, vector<8x1088xbf16>
    tpu.vector_store %arg11[%c24_47, %c0_48], %64 {strides = array<i32>} : memref<72x1088xbf16, #tpu.memory_space<vmem>>, vector<8x1088xbf16>,
    %66 = vector.extract_strided_slice %57 {offsets = [0, 35], sizes = [8, 1088], strides = [1, 1]} : vector<8x1190xbf16> to vector<8x1088xbf16>
    %c32_49 = arith.constant 32 : index
    %c0_50 = arith.constant 0 : index
    %67 = vector.load %arg11[%c32_49, %c0_50] : memref<72x1088xbf16, #tpu.memory_space<vmem>>, vector<8x1088xbf16>
    tpu.vector_store %arg11[%c32_49, %c0_50], %66 {strides = array<i32>} : memref<72x1088xbf16, #tpu.memory_space<vmem>>, vector<8x1088xbf16>,
    %68 = vector.extract_strided_slice %57 {offsets = [0, 36], sizes = [8, 1088], strides = [1, 1]} : vector<8x1190xbf16> to vector<8x1088xbf16>
    %c40_51 = arith.constant 40 : index
    %c0_52 = arith.constant 0 : index
    %69 = vector.load %arg11[%c40_51, %c0_52] : memref<72x1088xbf16, #tpu.memory_space<vmem>>, vector<8x1088xbf16>
    tpu.vector_store %arg11[%c40_51, %c0_52], %68 {strides = array<i32>} : memref<72x1088xbf16, #tpu.memory_space<vmem>>, vector<8x1088xbf16>,
    %70 = vector.extract_strided_slice %57 {offsets = [0, 68], sizes = [8, 1088], strides = [1, 1]} : vector<8x1190xbf16> to vector<8x1088xbf16>
    %c48_53 = arith.constant 48 : index
    %c0_54 = arith.constant 0 : index
    %71 = vector.load %arg11[%c48_53, %c0_54] : memref<72x1088xbf16, #tpu.memory_space<vmem>>, vector<8x1088xbf16>
    tpu.vector_store %arg11[%c48_53, %c0_54], %70 {strides = array<i32>} : memref<72x1088xbf16, #tpu.memory_space<vmem>>, vector<8x1088xbf16>,
    %72 = vector.extract_strided_slice %57 {offsets = [0, 69], sizes = [8, 1088], strides = [1, 1]} : vector<8x1190xbf16> to vector<8x1088xbf16>
    %c56_55 = arith.constant 56 : index
    %c0_56 = arith.constant 0 : index
    %73 = vector.load %arg11[%c56_55, %c0_56] : memref<72x1088xbf16, #tpu.memory_space<vmem>>, vector<8x1088xbf16>
    tpu.vector_store %arg11[%c56_55, %c0_56], %72 {strides = array<i32>} : memref<72x1088xbf16, #tpu.memory_space<vmem>>, vector<8x1088xbf16>,
    %74 = vector.extract_strided_slice %57 {offsets = [0, 70], sizes = [8, 1088], strides = [1, 1]} : vector<8x1190xbf16> to vector<8x1088xbf16>
    %c64_57 = arith.constant 64 : index
    %c0_58 = arith.constant 0 : index
    %75 = vector.load %arg11[%c64_57, %c0_58] : memref<72x1088xbf16, #tpu.memory_space<vmem>>, vector<8x1088xbf16>
    tpu.vector_store %arg11[%c64_57, %c0_58], %74 {strides = array<i32>} : memref<72x1088xbf16, #tpu.memory_space<vmem>>, vector<8x1088xbf16>,
    %c0_59 = arith.constant 0 : index
    %c0_60 = arith.constant 0 : index
    %76 = vector.load %arg5[%c0_59, %c0_60] : memref<8x72xbf16, #tpu.memory_space<vmem>>, vector<8x72xbf16>
    %c0_61 = arith.constant 0 : index
    %c0_62 = arith.constant 0 : index
    %77 = vector.load %arg11[%c0_61, %c0_62] : memref<72x1088xbf16, #tpu.memory_space<vmem>>, vector<72x1088xbf16>
    %cst_63 = arith.constant dense<0.000000e+00> : vector<8x1088xf32>
    %78 = tpu.matmul %76, %77, %cst_63 {dimension_numbers = #tpu.dot_dimension_numbers<[1], [0], [0], [1], [0, 0, 1, 1], [], []>} : vector<8x72xbf16>, vector<72x1088xbf16>, vector<8x1088xf32> -> vector<8x1088xf32>
    %c0_64 = arith.constant 0 : index
    %c0_65 = arith.constant 0 : index
    %79 = vector.load %arg6[%c0_64, %c0_65] : memref<8x1xf32, #tpu.memory_space<vmem>>, vector<8x1xf32>
    %80 = vector.broadcast %79 : vector<8x1xf32> to vector<8x1088xf32>
    %81 = arith.addf %78, %80 : vector<8x1088xf32>
    %cst_66 = arith.constant 0.000000e+00 : f32
    %82 = vector.broadcast %cst_66 : f32 to vector<8x1088xf32>
    %83 = arith.maximumf %81, %82 : vector<8x1088xf32>
    %c0_67 = arith.constant 0 : index
    %c0_68 = arith.constant 0 : index
    %c0_69 = arith.constant 0 : index
    %84 = vector.load %arg8[%c0_67, %c0_68, %c0_69] : memref<1x8x1088xf32, #tpu.memory_space<vmem>>, vector<1x8x1088xf32>
    %85 = vector.shape_cast %84 : vector<1x8x1088xf32> to vector<8x1088xf32>
    %86 = vector.shape_cast %83 : vector<8x1088xf32> to vector<1x8x1088xf32>
    tpu.vector_store %arg8[%c0_67, %c0_68, %c0_69], %86 {strides = array<i32>} : memref<1x8x1088xf32, #tpu.memory_space<vmem>>, vector<1x8x1088xf32>,
    return
  }
  func.func @transform_0(%arg0: i32) -> (i32, i32, i32) {
    %c0_i32 = arith.constant 0 : i32
    %c0_i32_0 = arith.constant 0 : i32
    %c0_i32_1 = arith.constant 0 : i32
    return %arg0, %c0_i32, %c0_i32_0 : i32, i32, i32
  }
  func.func @transform_1(%arg0: i32) -> (i32, i32, i32) {
    %c0_i32 = arith.constant 0 : i32
    %c0_i32_0 = arith.constant 0 : i32
    %c0_i32_1 = arith.constant 0 : i32
    return %arg0, %c0_i32, %c0_i32_0 : i32, i32, i32
  }
  func.func @transform_2(%arg0: i32) -> (i32, i32) {
    %c0_i32 = arith.constant 0 : i32
    %c0_i32_0 = arith.constant 0 : i32
    %c0_i32_1 = arith.constant 0 : i32
    return %c0_i32, %c0_i32_0 : i32, i32
  }
  func.func @transform_3(%arg0: i32) -> (i32, i32) {
    %c0_i32 = arith.constant 0 : i32
    %c0_i32_0 = arith.constant 0 : i32
    %c0_i32_1 = arith.constant 0 : i32
    return %c0_i32, %c0_i32_0 : i32, i32
  }
  func.func @transform_4(%arg0: i32) -> (i32, i32) {
    %c0_i32 = arith.constant 0 : i32
    %c0_i32_0 = arith.constant 0 : i32
    %c0_i32_1 = arith.constant 0 : i32
    return %c0_i32, %c0_i32_0 : i32, i32
  }
  func.func @transform_5(%arg0: i32) -> (i32, i32) {
    %c0_i32 = arith.constant 0 : i32
    %c0_i32_0 = arith.constant 0 : i32
    %c0_i32_1 = arith.constant 0 : i32
    return %c0_i32, %c0_i32_0 : i32, i32
  }
  func.func @transform_6(%arg0: i32) -> (i32, i32) {
    %c0_i32 = arith.constant 0 : i32
    %c0_i32_0 = arith.constant 0 : i32
    %c0_i32_1 = arith.constant 0 : i32
    return %c0_i32, %c0_i32_0 : i32, i32
  }
  func.func @transform_7(%arg0: i32) -> (i32, i32, i32) {
    %c0_i32 = arith.constant 0 : i32
    %c0_i32_0 = arith.constant 0 : i32
    %c0_i32_1 = arith.constant 0 : i32
    return %arg0, %c0_i32, %c0_i32_0 : i32, i32, i32
  }
}

</mosaic_0001>

<llo_original>
// kernel: up_forward.2
$region0: #{up_forward.2}
  #allocation0 [shape = 'u32[]', space=smem, size = 0x4, offset = 0x4, fixed_abs, tag = 'smem constant byte address 0x4 - core index']
  #allocation1 [shape = 'u32[72,128]{1,0:T(1,128)}', space=vmem, size = 0x9000, scoped, tag = 'internal scratch']
  %s0 = inlined_call_operand.vmem [shape: f32[2,4,16,16], index: 0, kind: input, shape index: {}]
  %s1 = inlined_call_operand.vmem [shape: f32[35,16], index: 1, kind: input, shape index: {}]
  %s2 = inlined_call_operand.vmem [shape: f32[16,34], index: 2, kind: input, shape index: {}]
  %s3 = inlined_call_operand.vmem [shape: bf16[2,4,35,34], index: 3, kind: output, shape index: {}]
  %s4 = sld [smem:[#allocation0]]
  $region45: #{up_forward.2} parent=0
    _
  %s6 = ssub.s32 1, %s4
  %s7 = scalar_select 0, %s6, %s4
  loop: start=0, step=1, limit=10
  $region2: #{up_forward.2} parent=0 // loop_pre_header
    _
  $region3: #{up_forward.2} parent=0 // loop_header
    %s9 = sphi 0, %s13
    %p10 = scmp.ge.s32.totalorder %s9, 10
    %s16 = sphi 0, %s28
    %s17 = sphi 0, %s24
    %s18 = sphi 0, %s16
    %s19 = sphi 0, %s17
    %s20 = sphi 0, %s18
    %s21 = sphi 0, %s19
    %s33 = sphi 0, %s35
    %s36 = sphi 0, %s33
    %s37 = sphi 0, %s36
    %s53 = sphi 0, %s37
    %s57 = sphi 0, %s57
    %s59 = sphi 0, %s57
    %s60 = sphi 0, %s59
    %s74 = sphi 0, %s60
    %s78 = sphi 0, %s78
    %s80 = sphi 0, %s78
    %s81 = sphi 0, %s80
    %s95 = sphi 0, %s81
    %s103 = sphi 0, %s105
    %s106 = sphi 0, %s103
    %s107 = sphi 0, %s106
    %s123 = sphi 0, %s107
  $region4: #{up_forward.2} parent=0 // loop_header_branch
    %12 = sbr.rel (%p10) target = $region8
  $region5: #{up_forward.2} parent=0 // loop_body
    %s14 = ssub.s32 %s9, 1
    %s15 = ssub.s32 %s9, 2
    %s22 = sadd.s32 1, %s17
    %p23 = scmp.ge.s32.totalorder %s22, 4
    %s24 = scalar_select %p23, 0, %s22
    %s25 = sadd.s32 1, %s16
    %s26 = scalar_select %p23, %s25, %s16
    %p27 = scmp.ge.s32.totalorder %s26, 2
    %s28 = scalar_select %p27, 0, %s26
    %s29 = ssub.s32 %s16, %s28
    %s30 = ssub.s32 %s17, %s24
    %s31 = sor.u32 %s29, %s30
    %p32 = scmp.eq.s32.totalorder %s31, 0
    %s34 = sadd.s32 %s33, 1
    %s35 = scalar_select %p32, %s33, %s34
    %p38 = pneg %p32
    %p39 = scmp.eq.s32.totalorder %s9, 7
    %p40 = por %p38, %p39
    %p41 = scmp.ne.s32.totalorder %s33, %s36
    %p42 = scmp.eq.s32.totalorder %s9, 0
    %p43 = por %p41, %p42
    %p44 = scmp.ne.s32.totalorder %s33, %s36
    %p45 = scmp.eq.s32.totalorder %s14, 7
    %p46 = por %p44, %p45
    %p47 = scmp.ne.s32.totalorder %s36, %s37
    %p48 = scmp.eq.s32.totalorder %s14, 0
    %p49 = por %p47, %p48
    %p50 = scmp.ne.s32.totalorder %s36, %s37
    %p51 = scmp.eq.s32.totalorder %s15, 7
    %p52 = por %p50, %p51
    %p54 = scmp.ne.s32.totalorder %s37, %s53
    %p55 = scmp.eq.s32.totalorder %s15, 0
    %p56 = por %p54, %p55
    %s58 = sadd.s32 %s57, 1
    %p61 = scmp.eq.s32.totalorder %s9, 7
    %p62 = scmp.ne.s32.totalorder %s57, %s59
    %p63 = scmp.eq.s32.totalorder %s9, 0
    %p64 = por %p62, %p63
    %p65 = scmp.ne.s32.totalorder %s57, %s59
    %p66 = scmp.eq.s32.totalorder %s14, 7
    %p67 = por %p65, %p66
    %p68 = scmp.ne.s32.totalorder %s59, %s60
    %p69 = scmp.eq.s32.totalorder %s14, 0
    %p70 = por %p68, %p69
    %p71 = scmp.ne.s32.totalorder %s59, %s60
    %p72 = scmp.eq.s32.totalorder %s15, 7
    %p73 = por %p71, %p72
    %p75 = scmp.ne.s32.totalorder %s60, %s74
    %p76 = scmp.eq.s32.totalorder %s15, 0
    %p77 = por %p75, %p76
    %s79 = sadd.s32 %s78, 1
    %p82 = scmp.eq.s32.totalorder %s9, 7
    %p83 = scmp.ne.s32.totalorder %s78, %s80
    %p84 = scmp.eq.s32.totalorder %s9, 0
    %p85 = por %p83, %p84
    %p86 = scmp.ne.s32.totalorder %s78, %s80
    %p87 = scmp.eq.s32.totalorder %s14, 7
    %p88 = por %p86, %p87
    %p89 = scmp.ne.s32.totalorder %s80, %s81
    %p90 = scmp.eq.s32.totalorder %s14, 0
    %p91 = por %p89, %p90
    %p92 = scmp.ne.s32.totalorder %s80, %s81
    %p93 = scmp.eq.s32.totalorder %s15, 7
    %p94 = por %p92, %p93
    %p96 = scmp.ne.s32.totalorder %s81, %s95
    %p97 = scmp.eq.s32.totalorder %s15, 0
    %p98 = por %p96, %p97
    %s99 = ssub.s32 %s16, %s28
    %s100 = ssub.s32 %s17, %s24
    %s101 = sor.u32 %s99, %s100
    %p102 = scmp.eq.s32.totalorder %s101, 0
    %s104 = sadd.s32 %s103, 1
    %s105 = scalar_select %p102, %s103, %s104
    %p108 = pneg %p102
    %p109 = scmp.eq.s32.totalorder %s9, 7
    %p110 = por %p108, %p109
    %p111 = scmp.ne.s32.totalorder %s103, %s106
    %p112 = scmp.eq.s32.totalorder %s9, 0
    %p113 = por %p111, %p112
    %p114 = scmp.ne.s32.totalorder %s103, %s106
    %p115 = scmp.eq.s32.totalorder %s14, 7
    %p116 = por %p114, %p115
    %p117 = scmp.ne.s32.totalorder %s106, %s107
    %p118 = scmp.eq.s32.totalorder %s14, 0
    %p119 = por %p117, %p118
    %p120 = scmp.ne.s32.totalorder %s106, %s107
    %p121 = scmp.eq.s32.totalorder %s15, 7
    %p122 = por %p120, %p121
    %p124 = scmp.ne.s32.totalorder %s107, %s123
    %p125 = scmp.eq.s32.totalorder %s15, 0
    %p126 = por %p124, %p125
    %p127 = scmp.le.s32.totalorder 1, %s9
    %p128 = scmp.lt.s32.totalorder %s9, 9
    %p129 = pnand %p127, %p128
    %p130 = pneg %p129
    // Predicated region
    $region9: #{up_forward.2} parent=5 // pred_check
      _
    $region10: #{up_forward.2} parent=5 // pred_check_branch
      %132 = sbr.rel (%p129) target = $region12
    $region11: #{up_forward.2} parent=5 // pred_region
      %s133 = ssub.s32 %s9, 1
      // Predicated region
      $region13: #{up_forward.2} parent=11 // pred_check
        %p134 = pneg %p70
      $region14: #{up_forward.2} parent=11 // pred_check_branch
        %136 = sbr.rel (%p134) target = $region16
      $region15: #{up_forward.2} parent=11 // pred_region
        _
      $region16: #{up_forward.2} parent=11 // pred_fallthru
        _
      // Predicated region
      $region17: #{up_forward.2} parent=11 // pred_check
        %p137 = pneg %p91
      $region18: #{up_forward.2} parent=11 // pred_check_branch
        %139 = sbr.rel (%p137) target = $region20
      $region19: #{up_forward.2} parent=11 // pred_region
        _
      $region20: #{up_forward.2} parent=11 // pred_fallthru
        _
    $region12: #{up_forward.2} parent=5 // pred_fallthru
      _
    %p140 = scmp.lt.s32.totalorder %s9, 8
    // Predicated region
    $region21: #{up_forward.2} parent=5 // pred_check
      %p141 = pneg %p140
    $region22: #{up_forward.2} parent=5 // pred_check_branch
      %143 = sbr.rel (%p141) target = $region24
    $region23: #{up_forward.2} parent=5 // pred_region
      // Predicated region
      $region25: #{up_forward.2} parent=23 // pred_check
        %p144 = pneg %p43
      $region26: #{up_forward.2} parent=23 // pred_check_branch
        %146 = sbr.rel (%p144) target = $region28
      $region27: #{up_forward.2} parent=23 // pred_region
        %p147 = scmp.lt.s32.totalorder %s16, 1
        %s148 = scalar_select %p147, %s16, 1
        %p149 = scmp.lt.s32.totalorder %s17, 3
        %s150 = scalar_select %p149, %s17, 3
        %s151 = smul.addr %s150, 2
        %s152 = smul.addr %s148, 8
        %s153 = sadd.s32 %s151, %s152
        %s154 = smul.addr %s153, 8
        %s155 = scalar_lea.vmem %s0, %s154
      $region28: #{up_forward.2} parent=23 // pred_fallthru
        _
    $region24: #{up_forward.2} parent=5 // pred_fallthru
      _
    %p156 = scmp.le.s32.totalorder 1, %s9
    %p157 = scmp.lt.s32.totalorder %s9, 9
    %p158 = pnand %p156, %p157
    %p159 = pneg %p158
    // Predicated region
    $region29: #{up_forward.2} parent=5 // pred_check
      _
    $region30: #{up_forward.2} parent=5 // pred_check_branch
      %161 = sbr.rel (%p158) target = $region32
    $region31: #{up_forward.2} parent=5 // pred_region
      %s162 = ssub.s32 %s9, 1
      %p163 = scmp.lt.s32.totalorder %s18, 1
      %s164 = scalar_select %p163, %s18, 1
      %p165 = scmp.lt.s32.totalorder %s19, 3
      %s166 = scalar_select %p165, %s19, 3
      %s167 = smul.addr %s166, 2
      %s168 = smul.addr %s164, 8
      %s169 = sadd.s32 %s167, %s168
      %s170 = smul.addr %s169, 8
      %s171 = scalar_lea.vmem %s0, %s170
      %p172 = pneg %p49
      %p173 = pneg %p46
      %p174 = pneg %p70
      %p175 = pneg %p67
      %p176 = pneg %p91
      %p177 = pneg %p88
      %p178 = pneg %p119
      %p179 = pneg %p116
      %p180 = scmp.lt.s32.totalorder %s18, 1
      %s181 = scalar_select %p180, %s18, 1
      %p182 = scmp.lt.s32.totalorder %s19, 3
      %s183 = scalar_select %p182, %s19, 3
      %s184 = smul.addr %s183, 5
      %s185 = smul.addr %s181, 20
      %s186 = sadd.s32 %s184, %s185
      %s187 = smul.addr %s186, 4
      %s188 = scalar_lea.vmem %s3, %s187
      %p189 = scmp.lt.s32.totalorder %s18, 1
      %s190 = scalar_select %p189, %s18, 1
      %p191 = scmp.lt.s32.totalorder %s19, 3
      %s192 = scalar_select %p191, %s19, 3
      %s193 = smul.addr %s192, 2
      %s194 = smul.addr %s190, 8
      %s195 = sadd.s32 %s193, %s194
      %s196 = smul.addr %s195, 8
      %s197 = scalar_lea.vmem %s0, %s196
      %p198 = scmp.lt.s32.totalorder %s18, 1
      %s199 = scalar_select %p198, %s18, 1
      %p200 = scmp.lt.s32.totalorder %s19, 3
      %s201 = scalar_select %p200, %s19, 3
      %s202 = smul.addr %s201, 5
      %s203 = smul.addr %s199, 20
      %s204 = sadd.s32 %s202, %s203
      %s205 = smul.addr %s204, 4
      %s206 = scalar_lea.vmem %s3, %s205
      %v207 = vld [vmem:[%s197] sm:$0xff]
      %v208 = vld [vmem:[%s197 + $0x8] sm:$0xff]
      %v209 = vld [vmem:[%s2] sm:$0xff]
      %v210 = vld [vmem:[%s2 + $0x8] sm:$0xff]
      %vm211 = vcmask 130048
      %v213 = vsel %vm211, %v207, 0
      %v216 = vsel %vm211, %v208, 0
      %218 = vmatpush.msra.mxu0 0.0
      %219 = vmatpush.msra.mxu0 0.0
      %220 = vmatpush.msra.mxu0 0.0
      %221 = vmatpush.msra.mxu0 0.0
      %222 = vmatpush.msra.mxu0 0.0
      %223 = vmatpush.msra.mxu0 0.0
      %224 = vmatpush.msra.mxu0 0.0
      %225 = vmatpush.msra.mxu0 0.0
      %226 = vmatpush.msra.mxu0 0.0
      %227 = vmatpush.msra.mxu0 0.0
      %228 = vmatpush.msra.mxu0 0.0
      %229 = vmatpush.msra.mxu0 0.0
      %230 = vmatpush.msra.mxu0 0.0
      %231 = vmatpush.msra.mxu0 0.0
      %232 = vmatpush.msra.mxu0 %v210
      %233 = vmatpush.msra.mxu0 %v209
      %234 = vmatmul.f32.gmra.mxu0 %v213
      %v235 = vpop.f32.mrf.mxu0
      %v236 = vadd.f32 0.0, %v235
      %237 = vmatmul.f32.gmra.mxu0 %v216
      %v238 = vpop.f32.mrf.mxu0
      %v239 = vadd.f32 0.0, %v238
      %240 = vdwg.mxu0
      %v241 = vld [vmem:[%s1] sm:$0xff]
      %v242 = vld [vmem:[%s1 + $0x8] sm:$0xff]
      %v243 = vld [vmem:[%s1 + $0x10] sm:$0xff]
      %v244 = vld [vmem:[%s1 + $0x18] sm:$0xff]
      %v245 = vld [vmem:[%s1 + $0x20] sm:$0x7]
      %v247 = vsel %vm211, %v241, 0
      %v250 = vsel %vm211, %v242, 0
      %v253 = vsel %vm211, %v243, 0
      %v256 = vsel %vm211, %v244, 0
      %v259 = vsel %vm211, %v245, 0
      %261 = vmatpush.msra.mxu0 0.0
      %262 = vmatpush.msra.mxu0 0.0
      %263 = vmatpush.msra.mxu0 0.0
      %264 = vmatpush.msra.mxu0 0.0
      %265 = vmatpush.msra.mxu0 0.0
      %266 = vmatpush.msra.mxu0 0.0
      %267 = vmatpush.msra.mxu0 0.0
      %268 = vmatpush.msra.mxu0 0.0
      %269 = vmatpush.msra.mxu0 0.0
      %270 = vmatpush.msra.mxu0 0.0
      %271 = vmatpush.msra.mxu0 0.0
      %272 = vmatpush.msra.mxu0 0.0
      %273 = vmatpush.msra.mxu0 0.0
      %274 = vmatpush.msra.mxu0 0.0
      %275 = vmatpush.msra.mxu0 %v239
      %276 = vmatpush.msra.mxu0 %v236
      %277 = vmatmul.f32.gmra.mxu0 %v247
      %v278 = vpop.f32.mrf.mxu0
      %v279 = vadd.f32 0.0, %v278
      %280 = vmatmul.f32.gmra.mxu0 %v250
      %v281 = vpop.f32.mrf.mxu0
      %v282 = vadd.f32 0.0, %v281
      %283 = vmatmul.f32.gmra.mxu0 %v253
      %v284 = vpop.f32.mrf.mxu0
      %v285 = vadd.f32 0.0, %v284
      %286 = vmatmul.f32.gmra.mxu0 %v256
      %v287 = vpop.f32.mrf.mxu0
      %v288 = vadd.f32 0.0, %v287
      %289 = vmatmul.f32.gmra.mxu0 %v259
      %v290 = vpop.f32.mrf.mxu0
      %v291 = vadd.f32 0.0, %v290
      %292 = vdwg.mxu0
      %v293 = vpack.c.bf16 %v279, %v279
      %v294 = vpack.c.bf16 %v282, %v282
      %v295 = vpack.c.bf16 %v285, %v285
      %v296 = vpack.c.bf16 %v288, %v288
      %v297 = vpack.c.bf16 %v291, %v291
      %vm298 = vcmask 273408
      %299 = vst.msk [vmem:[%s206] sm:$0xf] %vm298, %v293
      %300 = vst.msk [vmem:[%s206 + $0x4] sm:$0xf] %vm298, %v294
      %301 = vst.msk [vmem:[%s206 + $0x8] sm:$0xf] %vm298, %v295
      %302 = vst.msk [vmem:[%s206 + $0xc] sm:$0xf] %vm298, %v296
      %vm303 = vcmask 271360
      %vm304 = vsmask.f32 1280
      %vm305 = vmand %vm303, %vm304
      %v306 = vld [vmem:[%s206 + $0x10] sm:$0x3]
      %v307 = vsel %vm305, %v297, %v306
      %308 = vst [vmem:[%s206 + $0x10] sm:$0x3] %v307
      %p309 = scmp.lt.s32.totalorder %s18, 1
      %s310 = scalar_select %p309, %s18, 1
      %p311 = scmp.lt.s32.totalorder %s19, 3
      %s312 = scalar_select %p311, %s19, 3
      %s313 = smul.addr %s312, 5
      %s314 = smul.addr %s310, 20
      %s315 = sadd.s32 %s313, %s314
      %s316 = smul.addr %s315, 4
      %s317 = scalar_lea.vmem %s3, %s316
      // Predicated region
      $region33: #{up_forward.2} parent=31 // pred_check
        %p318 = pneg %p116
      $region34: #{up_forward.2} parent=31 // pred_check_branch
        %320 = sbr.rel (%p318) target = $region36
      $region35: #{up_forward.2} parent=31 // pred_region
        _
      $region36: #{up_forward.2} parent=31 // pred_fallthru
        _
    $region32: #{up_forward.2} parent=5 // pred_fallthru
      _
    %p321 = scmp.le.s32.totalorder 2, %s9
    // Predicated region
    $region37: #{up_forward.2} parent=5 // pred_check
      %p322 = pneg %p321
    $region38: #{up_forward.2} parent=5 // pred_check_branch
      %324 = sbr.rel (%p322) target = $region40
    $region39: #{up_forward.2} parent=5 // pred_region
      %s325 = ssub.s32 %s9, 2
      // Predicated region
      $region41: #{up_forward.2} parent=39 // pred_check
        %p326 = pneg %p122
      $region42: #{up_forward.2} parent=39 // pred_check_branch
        %328 = sbr.rel (%p326) target = $region44
      $region43: #{up_forward.2} parent=39 // pred_region
        %p329 = scmp.lt.s32.totalorder %s20, 1
        %s330 = scalar_select %p329, %s20, 1
        %p331 = scmp.lt.s32.totalorder %s21, 3
        %s332 = scalar_select %p331, %s21, 3
        %s333 = smul.addr %s332, 5
        %s334 = smul.addr %s330, 20
        %s335 = sadd.s32 %s333, %s334
        %s336 = smul.addr %s335, 4
        %s337 = scalar_lea.vmem %s3, %s336
      $region44: #{up_forward.2} parent=39 // pred_fallthru
        _
    $region40: #{up_forward.2} parent=5 // pred_fallthru
      _
  $region6: #{up_forward.2} parent=0 // loop_footer
    %s13 = sadd.s32 1, %s9
  $region7: #{up_forward.2} parent=0 // loop_footer_branch
    %8 = sbr.rel target = $region3
  $region8: #{up_forward.2} parent=0 // loop_exit
    _

// kernel: up_forward.3
$region0: #{up_forward.3}
  #allocation0 [shape = 'u32[]', space=smem, size = 0x4, offset = 0x4, fixed_abs, tag = 'smem constant byte address 0x4 - core index']
  #allocation1 [shape = 'u32[72,128]{1,0:T(1,128)}', space=vmem, size = 0x9000, scoped, tag = 'internal scratch']
  #allocation2 [shape = 'bf16[72,1088]{1,0:T(8,128)(2,1)}', space=vmem, size = 0x28800, scoped, tag = 'scratch operand']
  #allocation3 [shape = 'bf16[8,1190]{1,0:T(8,128)(2,1)}', space=vmem, size = 0x5000, scoped, tag = 'scratch operand']
  #allocation4 [shape = 'bf16[72,1088]{1,0:T(8,128)(2,1)}', space=vmem, size = 0x28800, scoped, tag = 'scratch operand']
  %s0 = inlined_call_operand.vmem [shape: bf16[2,4,1190], index: 0, kind: input, shape index: {}]
  %s1 = inlined_call_operand.vmem [shape: bf16[2,4,1190], index: 1, kind: input, shape index: {}]
  %s2 = inlined_call_operand.vmem [shape: bf16[8,72], index: 2, kind: input, shape index: {}]
  %s3 = inlined_call_operand.vmem [shape: f32[8,1], index: 3, kind: input, shape index: {}]
  %s4 = inlined_call_operand.vmem [shape: bf16[8,72], index: 4, kind: input, shape index: {}]
  %s5 = inlined_call_operand.vmem [shape: f32[8,1], index: 5, kind: input, shape index: {}]
  %s6 = inlined_call_operand.vmem [shape: f32[1,1088], index: 6, kind: input, shape index: {}]
  %s7 = inlined_call_operand.vmem [shape: f32[2,8,1088], index: 7, kind: output, shape index: {}]
  %s8 = sld [smem:[#allocation0]]
  $region61: #{up_forward.3} parent=0
    _
  %s10 = ssub.s32 1, %s8
  %s11 = scalar_select 0, %s10, %s8
  loop: start=0, step=1, limit=4
  $region2: #{up_forward.3} parent=0 // loop_pre_header
    _
  $region3: #{up_forward.3} parent=0 // loop_header
    %s13 = sphi 0, %s17
    %p14 = scmp.ge.s32.totalorder %s13, 4
    %s23 = sphi 0, %s25
    %s26 = sphi 0, %s23
    %s27 = sphi 0, %s26
    %s43 = sphi 0, %s27
    %s49 = sphi 0, %s51
    %s52 = sphi 0, %s49
    %s53 = sphi 0, %s52
    %s69 = sphi 0, %s53
    %s73 = sphi 0, %s73
    %s75 = sphi 0, %s73
    %s76 = sphi 0, %s75
    %s90 = sphi 0, %s76
    %s94 = sphi 0, %s94
    %s96 = sphi 0, %s94
    %s97 = sphi 0, %s96
    %s111 = sphi 0, %s97
    %s115 = sphi 0, %s115
    %s117 = sphi 0, %s115
    %s118 = sphi 0, %s117
    %s132 = sphi 0, %s118
    %s136 = sphi 0, %s136
    %s138 = sphi 0, %s136
    %s139 = sphi 0, %s138
    %s153 = sphi 0, %s139
    %s157 = sphi 0, %s157
    %s159 = sphi 0, %s157
    %s160 = sphi 0, %s159
    %s174 = sphi 0, %s160
    %s180 = sphi 0, %s182
    %s183 = sphi 0, %s180
    %s184 = sphi 0, %s183
    %s200 = sphi 0, %s184
  $region4: #{up_forward.3} parent=0 // loop_header_branch
    %16 = sbr.rel (%p14) target = $region8
  $region5: #{up_forward.3} parent=0 // loop_body
    %s18 = ssub.s32 %s13, 1
    %s19 = ssub.s32 %s13, 2
    %s20 = sadd.s32 %s13, 1
    %s21 = ssub.s32 %s13, %s20
    %p22 = scmp.eq.s32.totalorder %s21, 0
    %s24 = sadd.s32 %s23, 1
    %s25 = scalar_select %p22, %s23, %s24
    %p28 = pneg %p22
    %p29 = scmp.eq.s32.totalorder %s13, 1
    %p30 = por %p28, %p29
    %p31 = scmp.ne.s32.totalorder %s23, %s26
    %p32 = scmp.eq.s32.totalorder %s13, 0
    %p33 = por %p31, %p32
    %p34 = scmp.ne.s32.totalorder %s23, %s26
    %p35 = scmp.eq.s32.totalorder %s18, 1
    %p36 = por %p34, %p35
    %p37 = scmp.ne.s32.totalorder %s26, %s27
    %p38 = scmp.eq.s32.totalorder %s18, 0
    %p39 = por %p37, %p38
    %p40 = scmp.ne.s32.totalorder %s26, %s27
    %p41 = scmp.eq.s32.totalorder %s19, 1
    %p42 = por %p40, %p41
    %p44 = scmp.ne.s32.totalorder %s27, %s43
    %p45 = scmp.eq.s32.totalorder %s19, 0
    %p46 = por %p44, %p45
    %s47 = ssub.s32 %s13, %s20
    %p48 = scmp.eq.s32.totalorder %s47, 0
    %s50 = sadd.s32 %s49, 1
    %s51 = scalar_select %p48, %s49, %s50
    %p54 = pneg %p48
    %p55 = scmp.eq.s32.totalorder %s13, 1
    %p56 = por %p54, %p55
    %p57 = scmp.ne.s32.totalorder %s49, %s52
    %p58 = scmp.eq.s32.totalorder %s13, 0
    %p59 = por %p57, %p58
    %p60 = scmp.ne.s32.totalorder %s49, %s52
    %p61 = scmp.eq.s32.totalorder %s18, 1
    %p62 = por %p60, %p61
    %p63 = scmp.ne.s32.totalorder %s52, %s53
    %p64 = scmp.eq.s32.totalorder %s18, 0
    %p65 = por %p63, %p64
    %p66 = scmp.ne.s32.totalorder %s52, %s53
    %p67 = scmp.eq.s32.totalorder %s19, 1
    %p68 = por %p66, %p67
    %p70 = scmp.ne.s32.totalorder %s53, %s69
    %p71 = scmp.eq.s32.totalorder %s19, 0
    %p72 = por %p70, %p71
    %s74 = sadd.s32 %s73, 1
    %p77 = scmp.eq.s32.totalorder %s13, 1
    %p78 = scmp.ne.s32.totalorder %s73, %s75
    %p79 = scmp.eq.s32.totalorder %s13, 0
    %p80 = por %p78, %p79
    %p81 = scmp.ne.s32.totalorder %s73, %s75
    %p82 = scmp.eq.s32.totalorder %s18, 1
    %p83 = por %p81, %p82
    %p84 = scmp.ne.s32.totalorder %s75, %s76
    %p85 = scmp.eq.s32.totalorder %s18, 0
    %p86 = por %p84, %p85
    %p87 = scmp.ne.s32.totalorder %s75, %s76
    %p88 = scmp.eq.s32.totalorder %s19, 1
    %p89 = por %p87, %p88
    %p91 = scmp.ne.s32.totalorder %s76, %s90
    %p92 = scmp.eq.s32.totalorder %s19, 0
    %p93 = por %p91, %p92
    %s95 = sadd.s32 %s94, 1
    %p98 = scmp.eq.s32.totalorder %s13, 1
    %p99 = scmp.ne.s32.totalorder %s94, %s96
    %p100 = scmp.eq.s32.totalorder %s13, 0
    %p101 = por %p99, %p100
    %p102 = scmp.ne.s32.totalorder %s94, %s96
    %p103 = scmp.eq.s32.totalorder %s18, 1
    %p104 = por %p102, %p103
    %p105 = scmp.ne.s32.totalorder %s96, %s97
    %p106 = scmp.eq.s32.totalorder %s18, 0
    %p107 = por %p105, %p106
    %p108 = scmp.ne.s32.totalorder %s96, %s97
    %p109 = scmp.eq.s32.totalorder %s19, 1
    %p110 = por %p108, %p109
    %p112 = scmp.ne.s32.totalorder %s97, %s111
    %p113 = scmp.eq.s32.totalorder %s19, 0
    %p114 = por %p112, %p113
    %s116 = sadd.s32 %s115, 1
    %p119 = scmp.eq.s32.totalorder %s13, 1
    %p120 = scmp.ne.s32.totalorder %s115, %s117
    %p121 = scmp.eq.s32.totalorder %s13, 0
    %p122 = por %p120, %p121
    %p123 = scmp.ne.s32.totalorder %s115, %s117
    %p124 = scmp.eq.s32.totalorder %s18, 1
    %p125 = por %p123, %p124
    %p126 = scmp.ne.s32.totalorder %s117, %s118
    %p127 = scmp.eq.s32.totalorder %s18, 0
    %p128 = por %p126, %p127
    %p129 = scmp.ne.s32.totalorder %s117, %s118
    %p130 = scmp.eq.s32.totalorder %s19, 1
    %p131 = por %p129, %p130
    %p133 = scmp.ne.s32.totalorder %s118, %s132
    %p134 = scmp.eq.s32.totalorder %s19, 0
    %p135 = por %p133, %p134
    %s137 = sadd.s32 %s136, 1
    %p140 = scmp.eq.s32.totalorder %s13, 1
    %p141 = scmp.ne.s32.totalorder %s136, %s138
    %p142 = scmp.eq.s32.totalorder %s13, 0
    %p143 = por %p141, %p142
    %p144 = scmp.ne.s32.totalorder %s136, %s138
    %p145 = scmp.eq.s32.totalorder %s18, 1
    %p146 = por %p144, %p145
    %p147 = scmp.ne.s32.totalorder %s138, %s139
    %p148 = scmp.eq.s32.totalorder %s18, 0
    %p149 = por %p147, %p148
    %p150 = scmp.ne.s32.totalorder %s138, %s139
    %p151 = scmp.eq.s32.totalorder %s19, 1
    %p152 = por %p150, %p151
    %p154 = scmp.ne.s32.totalorder %s139, %s153
    %p155 = scmp.eq.s32.totalorder %s19, 0
    %p156 = por %p154, %p155
    %s158 = sadd.s32 %s157, 1
    %p161 = scmp.eq.s32.totalorder %s13, 1
    %p162 = scmp.ne.s32.totalorder %s157, %s159
    %p163 = scmp.eq.s32.totalorder %s13, 0
    %p164 = por %p162, %p163
    %p165 = scmp.ne.s32.totalorder %s157, %s159
    %p166 = scmp.eq.s32.totalorder %s18, 1
    %p167 = por %p165, %p166
    %p168 = scmp.ne.s32.totalorder %s159, %s160
    %p169 = scmp.eq.s32.totalorder %s18, 0
    %p170 = por %p168, %p169
    %p171 = scmp.ne.s32.totalorder %s159, %s160
    %p172 = scmp.eq.s32.totalorder %s19, 1
    %p173 = por %p171, %p172
    %p175 = scmp.ne.s32.totalorder %s160, %s174
    %p176 = scmp.eq.s32.totalorder %s19, 0
    %p177 = por %p175, %p176
    %s178 = ssub.s32 %s13, %s20
    %p179 = scmp.eq.s32.totalorder %s178, 0
    %s181 = sadd.s32 %s180, 1
    %s182 = scalar_select %p179, %s180, %s181
    %p185 = pneg %p179
    %p186 = scmp.eq.s32.totalorder %s13, 1
    %p187 = por %p185, %p186
    %p188 = scmp.ne.s32.totalorder %s180, %s183
    %p189 = scmp.eq.s32.totalorder %s13, 0
    %p190 = por %p188, %p189
    %p191 = scmp.ne.s32.totalorder %s180, %s183
    %p192 = scmp.eq.s32.totalorder %s18, 1
    %p193 = por %p191, %p192
    %p194 = scmp.ne.s32.totalorder %s183, %s184
    %p195 = scmp.eq.s32.totalorder %s18, 0
    %p196 = por %p194, %p195
    %p197 = scmp.ne.s32.totalorder %s183, %s184
    %p198 = scmp.eq.s32.totalorder %s19, 1
    %p199 = por %p197, %p198
    %p201 = scmp.ne.s32.totalorder %s184, %s200
    %p202 = scmp.eq.s32.totalorder %s19, 0
    %p203 = por %p201, %p202
    %p204 = scmp.le.s32.totalorder 1, %s13
    %p205 = scmp.lt.s32.totalorder %s13, 3
    %p206 = pnand %p204, %p205
    %p207 = pneg %p206
    // Predicated region
    $region9: #{up_forward.3} parent=5 // pred_check
      _
    $region10: #{up_forward.3} parent=5 // pred_check_branch
      %209 = sbr.rel (%p206) target = $region12
    $region11: #{up_forward.3} parent=5 // pred_region
      %s210 = ssub.s32 %s13, 1
      // Predicated region
      $region13: #{up_forward.3} parent=11 // pred_check
        %p211 = pneg %p86
      $region14: #{up_forward.3} parent=11 // pred_check_branch
        %213 = sbr.rel (%p211) target = $region16
      $region15: #{up_forward.3} parent=11 // pred_region
        _
      $region16: #{up_forward.3} parent=11 // pred_fallthru
        _
      // Predicated region
      $region17: #{up_forward.3} parent=11 // pred_check
        %p214 = pneg %p107
      $region18: #{up_forward.3} parent=11 // pred_check_branch
        %216 = sbr.rel (%p214) target = $region20
      $region19: #{up_forward.3} parent=11 // pred_region
        _
      $region20: #{up_forward.3} parent=11 // pred_fallthru
        _
      // Predicated region
      $region21: #{up_forward.3} parent=11 // pred_check
        %p217 = pneg %p128
      $region22: #{up_forward.3} parent=11 // pred_check_branch
        %219 = sbr.rel (%p217) target = $region24
      $region23: #{up_forward.3} parent=11 // pred_region
        _
      $region24: #{up_forward.3} parent=11 // pred_fallthru
        _
      // Predicated region
      $region25: #{up_forward.3} parent=11 // pred_check
        %p220 = pneg %p149
      $region26: #{up_forward.3} parent=11 // pred_check_branch
        %222 = sbr.rel (%p220) target = $region28
      $region27: #{up_forward.3} parent=11 // pred_region
        _
      $region28: #{up_forward.3} parent=11 // pred_fallthru
        _
      // Predicated region
      $region29: #{up_forward.3} parent=11 // pred_check
        %p223 = pneg %p170
      $region30: #{up_forward.3} parent=11 // pred_check_branch
        %225 = sbr.rel (%p223) target = $region32
      $region31: #{up_forward.3} parent=11 // pred_region
        _
      $region32: #{up_forward.3} parent=11 // pred_fallthru
        _
    $region12: #{up_forward.3} parent=5 // pred_fallthru
      _
    %p226 = scmp.lt.s32.totalorder %s13, 2
    // Predicated region
    $region33: #{up_forward.3} parent=5 // pred_check
      %p227 = pneg %p226
    $region34: #{up_forward.3} parent=5 // pred_check_branch
      %229 = sbr.rel (%p227) target = $region36
    $region35: #{up_forward.3} parent=5 // pred_region
      // Predicated region
      $region37: #{up_forward.3} parent=35 // pred_check
        %p230 = pneg %p33
      $region38: #{up_forward.3} parent=35 // pred_check_branch
        %232 = sbr.rel (%p230) target = $region40
      $region39: #{up_forward.3} parent=35 // pred_region
        %p233 = scmp.lt.s32.totalorder %s13, 1
        %s234 = scalar_select %p233, %s13, 1
        %s235 = smul.addr %s234, 10
        %s236 = smul.addr %s235, 2
        %s237 = scalar_lea.vmem %s0, %s236
      $region40: #{up_forward.3} parent=35 // pred_fallthru
        _
      // Predicated region
      $region41: #{up_forward.3} parent=35 // pred_check
        %p238 = pneg %p59
      $region42: #{up_forward.3} parent=35 // pred_check_branch
        %240 = sbr.rel (%p238) target = $region44
      $region43: #{up_forward.3} parent=35 // pred_region
        %p241 = scmp.lt.s32.totalorder %s13, 1
        %s242 = scalar_select %p241, %s13, 1
        %s243 = smul.addr %s242, 10
        %s244 = smul.addr %s243, 2
        %s245 = scalar_lea.vmem %s1, %s244
      $region44: #{up_forward.3} parent=35 // pred_fallthru
        _
    $region36: #{up_forward.3} parent=5 // pred_fallthru
      _
    %p246 = scmp.le.s32.totalorder 1, %s13
    %p247 = scmp.lt.s32.totalorder %s13, 3
    %p248 = pnand %p246, %p247
    %p249 = pneg %p248
    // Predicated region
    $region45: #{up_forward.3} parent=5 // pred_check
      _
    $region46: #{up_forward.3} parent=5 // pred_check_branch
      %251 = sbr.rel (%p248) target = $region48
    $region47: #{up_forward.3} parent=5 // pred_region
      %s252 = ssub.s32 %s13, 1
      %p253 = scmp.lt.s32.totalorder %s18, 1
      %s254 = scalar_select %p253, %s18, 1
      %s255 = smul.addr %s254, 10
      %s256 = smul.addr %s255, 2
      %s257 = scalar_lea.vmem %s0, %s256
      %p258 = pneg %p39
      %p259 = pneg %p36
      %p260 = scmp.lt.s32.totalorder %s18, 1
      %s261 = scalar_select %p260, %s18, 1
      %s262 = smul.addr %s261, 10
      %s263 = smul.addr %s262, 2
      %s264 = scalar_lea.vmem %s1, %s263
      %p265 = pneg %p65
      %p266 = pneg %p62
      %p267 = pneg %p86
      %p268 = pneg %p83
      %p269 = pneg %p107
      %p270 = pneg %p104
      %p271 = pneg %p128
      %p272 = pneg %p125
      %p273 = pneg %p149
      %p274 = pneg %p146
      %p275 = pneg %p170
      %p276 = pneg %p167
      %p277 = pneg %p196
      %p278 = pneg %p193
      %p279 = scmp.lt.s32.totalorder %s18, 1
      %s280 = scalar_select %p279, %s18, 1
      %s281 = smul.addr %s280, 9
      %s282 = smul.addr %s281, 8
      %s283 = scalar_lea.vmem %s7, %s282
      %p284 = scmp.lt.s32.totalorder %s18, 1
      %s285 = scalar_select %p284, %s18, 1
      %s286 = smul.addr %s285, 10
      %s287 = smul.addr %s286, 2
      %s288 = scalar_lea.vmem %s0, %s287
      %p289 = scmp.lt.s32.totalorder %s18, 1
      %s290 = scalar_select %p289, %s18, 1
      %s291 = smul.addr %s290, 10
      %s292 = smul.addr %s291, 2
      %s293 = scalar_lea.vmem %s1, %s292
      %p294 = scmp.lt.s32.totalorder %s18, 1
      %s295 = scalar_select %p294, %s18, 1
      %s296 = smul.addr %s295, 9
      %s297 = smul.addr %s296, 8
      %s298 = scalar_lea.vmem %s7, %s297
      %v300 = vld [vmem:[%s288] sm:$0xff]
      %v301 = vld [vmem:[%s288 + $0x8] sm:$0xff]
      %v302 = vld [vmem:[%s288 + $0x10] sm:$0xf]
      %v303 = vld [vmem:[%s293] sm:$0xff]
      %v304 = vld [vmem:[%s293 + $0x8] sm:$0xff]
      %v305 = vld [vmem:[%s293 + $0x10] sm:$0xf]
      %307 = vst [vmem:[#allocation1] ss:$2 sm:$0xff] %v300
      %s309 = scalar_lea.vmem [#allocation1], 16
      %310 = vst [vmem:[%s309] ss:$2 sm:$0xff] %v301
      %s312 = scalar_lea.vmem [#allocation1], 32
      %313 = vst [vmem:[%s312] ss:$2 sm:$0xff] %v302
      %v314 = vld.sshfl [vmem:[#allocation1] sm:$0xff pattern:$0x75643120]
      %v315 = vld.sshfl [vmem:[#allocation1 + $0x8] sm:$0xff pattern:$0x75643120]
      %v316 = vld.sshfl [vmem:[#allocation1 + $0x10] sm:$0xff pattern:$0x75643120]
      %v317 = vld.sshfl [vmem:[#allocation1 + $0x18] sm:$0xff pattern:$0x75643120]
      %v318 = vld.sshfl [vmem:[#allocation1 + $0x20] sm:$0xff pattern:$0x75643120]
      %324 = vst [vmem:[#allocation2] sm:$0x33] %v314
      %325 = vst [vmem:[#allocation2 + $0x8] sm:$0x33] %v315
      %326 = vst [vmem:[#allocation2 + $0x10] sm:$0x33] %v316
      %327 = vst [vmem:[#allocation2 + $0x18] sm:$0x33] %v317
      %vm328 = vcmask 517120
      %329 = vst.msk [vmem:[#allocation2 + $0x20] sm:$0x3] %vm328, %v318
      %s331 = scalar_lea.vmem [#allocation1], 1
      %332 = vst [vmem:[%s331] ss:$2 sm:$0xff] %v303
      %s334 = scalar_lea.vmem [#allocation1], 17
      %335 = vst [vmem:[%s334] ss:$2 sm:$0xff] %v304
      %s337 = scalar_lea.vmem [#allocation1], 33
      %338 = vst [vmem:[%s337] ss:$2 sm:$0xff] %v305
      %v339 = vld.sshfl [vmem:[#allocation1] sm:$0xff pattern:$0x75643120]
      %v340 = vld.sshfl [vmem:[#allocation1 + $0x8] sm:$0xff pattern:$0x75643120]
      %v341 = vld.sshfl [vmem:[#allocation1 + $0x10] sm:$0xff pattern:$0x75643120]
      %v342 = vld.sshfl [vmem:[#allocation1 + $0x18] sm:$0xff pattern:$0x75643120]
      %v343 = vld.sshfl [vmem:[#allocation1 + $0x20] sm:$0xff pattern:$0x75643120]
      %349 = vst [vmem:[#allocation2] sm:$0xcc] %v339
      %350 = vst [vmem:[#allocation2 + $0x8] sm:$0xcc] %v340
      %351 = vst [vmem:[#allocation2 + $0x10] sm:$0xcc] %v341
      %352 = vst [vmem:[#allocation2 + $0x18] sm:$0xcc] %v342
      %vm353 = vcmask 519170
      %354 = vst.msk [vmem:[#allocation2 + $0x20] sm:$0xc] %vm353, %v343
      %355 = vst [vmem:[#allocation1] ss:$2 sm:$0xff] %v300
      %s356 = scalar_lea.vmem [#allocation1], 16
      %357 = vst [vmem:[%s356] ss:$2 sm:$0xff] %v301
      %s358 = scalar_lea.vmem [#allocation1], 32
      %359 = vst [vmem:[%s358] ss:$2 sm:$0xff] %v302
      %v360 = vld.sshfl [vmem:[#allocation1] sm:$0xff pattern:$0x75643120]
      %v362 = vld.sshfl [vmem:[#allocation1 + $0x8] sm:$0xff pattern:$0x75643120]
      %v364 = vld.sshfl [vmem:[#allocation1 + $0x10] sm:$0xff pattern:$0x75643120]
      %v366 = vld.sshfl [vmem:[#allocation1 + $0x18] sm:$0xff pattern:$0x75643120]
      %v368 = vld.sshfl [vmem:[#allocation1 + $0x20] sm:$0xff pattern:$0x75643120]
      %370 = vrot.lane.b32.xlu0 %v360, 127
      %v371 = vpop.permute.xlu0 %370
      %372 = vrot.lane.b32.xlu0 %v362, 127
      %v373 = vpop.permute.xlu0 %372
      %374 = vrot.lane.b32.xlu0 %v364, 127
      %v375 = vpop.permute.xlu0 %374
      %376 = vrot.lane.b32.xlu0 %v366, 127
      %v377 = vpop.permute.xlu0 %376
      %378 = vrot.lane.b32.xlu0 %v368, 127
      %v379 = vpop.permute.xlu0 %378
      %v380 = vrot.slane %v371, 4
      %v381 = vrot.slane %v373, 4
      %v382 = vrot.slane %v375, 4
      %v383 = vrot.slane %v377, 4
      %v384 = vrot.slane %v379, 4
      %vm385 = vcmask 1043456
      %v386 = vsel %vm385, %v380, %v381
      %vm387 = vcmask 1039360
      %v388 = vsel %vm387, %v371, %v386
      %v389 = vsel %vm385, %v381, %v382
      %v390 = vsel %vm387, %v373, %v389
      %v391 = vsel %vm385, %v382, %v383
      %v392 = vsel %vm387, %v375, %v391
      %v393 = vsel %vm385, %v383, %v384
      %v394 = vsel %vm387, %v377, %v393
      %400 = vst [vmem:[#allocation2 + $0x24] sm:$0x33] %v388
      %401 = vst [vmem:[#allocation2 + $0x2c] sm:$0x33] %v390
      %402 = vst [vmem:[#allocation2 + $0x34] sm:$0x33] %v392
      %403 = vst [vmem:[#allocation2 + $0x3c] sm:$0x33] %v394
      %404 = vst.msk [vmem:[#allocation2 + $0x44] sm:$0x3] %vm328, %v379
      %s405 = scalar_lea.vmem [#allocation1], 1
      %406 = vst [vmem:[%s405] ss:$2 sm:$0xff] %v303
      %s407 = scalar_lea.vmem [#allocation1], 17
      %408 = vst [vmem:[%s407] ss:$2 sm:$0xff] %v304
      %s409 = scalar_lea.vmem [#allocation1], 33
      %410 = vst [vmem:[%s409] ss:$2 sm:$0xff] %v305
      %v411 = vld.sshfl [vmem:[#allocation1] sm:$0xff pattern:$0x75643120]
      %v413 = vld.sshfl [vmem:[#allocation1 + $0x8] sm:$0xff pattern:$0x75643120]
      %v415 = vld.sshfl [vmem:[#allocation1 + $0x10] sm:$0xff pattern:$0x75643120]
      %v417 = vld.sshfl [vmem:[#allocation1 + $0x18] sm:$0xff pattern:$0x75643120]
      %v419 = vld.sshfl [vmem:[#allocation1 + $0x20] sm:$0xff pattern:$0x75643120]
      %421 = vrot.lane.b32.xlu0 %v411, 127
      %v422 = vpop.permute.xlu0 %421
      %423 = vrot.lane.b32.xlu0 %v413, 127
      %v424 = vpop.permute.xlu0 %423
      %425 = vrot.lane.b32.xlu0 %v415, 127
      %v426 = vpop.permute.xlu0 %425
      %427 = vrot.lane.b32.xlu0 %v417, 127
      %v428 = vpop.permute.xlu0 %427
      %429 = vrot.lane.b32.xlu0 %v419, 127
      %v430 = vpop.permute.xlu0 %429
      %v431 = vrot.slane %v422, 4
      %v432 = vrot.slane %v424, 4
      %v433 = vrot.slane %v426, 4
      %v434 = vrot.slane %v428, 4
      %v435 = vrot.slane %v430, 4
      %v436 = vsel %vm385, %v431, %v432
      %v437 = vsel %vm387, %v422, %v436
      %v438 = vsel %vm385, %v432, %v433
      %v439 = vsel %vm387, %v424, %v438
      %v440 = vsel %vm385, %v433, %v434
      %v441 = vsel %vm387, %v426, %v440
      %v442 = vsel %vm385, %v434, %v435
      %v443 = vsel %vm387, %v428, %v442
      %449 = vst [vmem:[#allocation2 + $0x24] sm:$0xcc] %v437
      %450 = vst [vmem:[#allocation2 + $0x2c] sm:$0xcc] %v439
      %451 = vst [vmem:[#allocation2 + $0x34] sm:$0xcc] %v441
      %452 = vst [vmem:[#allocation2 + $0x3c] sm:$0xcc] %v443
      %453 = vst.msk [vmem:[#allocation2 + $0x44] sm:$0xc] %vm353, %v430
      %454 = vst [vmem:[#allocation1] ss:$2 sm:$0xff] %v300
      %s455 = scalar_lea.vmem [#allocation1], 16
      %456 = vst [vmem:[%s455] ss:$2 sm:$0xff] %v301
      %s457 = scalar_lea.vmem [#allocation1], 32
      %458 = vst [vmem:[%s457] ss:$2 sm:$0xff] %v302
      %v459 = vld.sshfl [vmem:[#allocation1] sm:$0xff pattern:$0x75643120]
      %v461 = vld.sshfl [vmem:[#allocation1 + $0x8] sm:$0xff pattern:$0x75643120]
      %v463 = vld.sshfl [vmem:[#allocation1 + $0x10] sm:$0xff pattern:$0x75643120]
      %v465 = vld.sshfl [vmem:[#allocation1 + $0x18] sm:$0xff pattern:$0x75643120]
      %v467 = vld.sshfl [vmem:[#allocation1 + $0x20] sm:$0xff pattern:$0x75643120]
      %469 = vrot.lane.b32.xlu0 %v459, 126
      %v470 = vpop.permute.xlu0 %469
      %471 = vrot.lane.b32.xlu0 %v461, 126
      %v472 = vpop.permute.xlu0 %471
      %473 = vrot.lane.b32.xlu0 %v463, 126
      %v474 = vpop.permute.xlu0 %473
      %475 = vrot.lane.b32.xlu0 %v465, 126
      %v476 = vpop.permute.xlu0 %475
      %477 = vrot.lane.b32.xlu0 %v467, 126
      %v478 = vpop.permute.xlu0 %477
      %v479 = vrot.slane %v470, 4
      %v480 = vrot.slane %v472, 4
      %v481 = vrot.slane %v474, 4
      %v482 = vrot.slane %v476, 4
      %v483 = vrot.slane %v478, 4
      %v484 = vsel %vm385, %v479, %v480
      %vm485 = vcmask 1031168
      %v486 = vsel %vm485, %v470, %v484
      %v487 = vsel %vm385, %v480, %v481
      %v488 = vsel %vm485, %v472, %v487
      %v489 = vsel %vm385, %v481, %v482
      %v490 = vsel %vm485, %v474, %v489
      %v491 = vsel %vm385, %v482, %v483
      %v492 = vsel %vm485, %v476, %v491
      %498 = vst [vmem:[#allocation2 + $0x48] sm:$0x33] %v486
      %499 = vst [vmem:[#allocation2 + $0x50] sm:$0x33] %v488
      %500 = vst [vmem:[#allocation2 + $0x58] sm:$0x33] %v490
      %501 = vst [vmem:[#allocation2 + $0x60] sm:$0x33] %v492
      %502 = vst.msk [vmem:[#allocation2 + $0x68] sm:$0x3] %vm328, %v478
      %s503 = scalar_lea.vmem [#allocation1], 1
      %504 = vst [vmem:[%s503] ss:$2 sm:$0xff] %v303
      %s505 = scalar_lea.vmem [#allocation1], 17
      %506 = vst [vmem:[%s505] ss:$2 sm:$0xff] %v304
      %s507 = scalar_lea.vmem [#allocation1], 33
      %508 = vst [vmem:[%s507] ss:$2 sm:$0xff] %v305
      %v509 = vld.sshfl [vmem:[#allocation1] sm:$0xff pattern:$0x75643120]
      %v511 = vld.sshfl [vmem:[#allocation1 + $0x8] sm:$0xff pattern:$0x75643120]
      %v513 = vld.sshfl [vmem:[#allocation1 + $0x10] sm:$0xff pattern:$0x75643120]
      %v515 = vld.sshfl [vmem:[#allocation1 + $0x18] sm:$0xff pattern:$0x75643120]
      %v517 = vld.sshfl [vmem:[#allocation1 + $0x20] sm:$0xff pattern:$0x75643120]
      %519 = vrot.lane.b32.xlu0 %v509, 126
      %v520 = vpop.permute.xlu0 %519
      %521 = vrot.lane.b32.xlu0 %v511, 126
      %v522 = vpop.permute.xlu0 %521
      %523 = vrot.lane.b32.xlu0 %v513, 126
      %v524 = vpop.permute.xlu0 %523
      %525 = vrot.lane.b32.xlu0 %v515, 126
      %v526 = vpop.permute.xlu0 %525
      %527 = vrot.lane.b32.xlu0 %v517, 126
      %v528 = vpop.permute.xlu0 %527
      %v529 = vrot.slane %v520, 4
      %v530 = vrot.slane %v522, 4
      %v531 = vrot.slane %v524, 4
      %v532 = vrot.slane %v526, 4
      %v533 = vrot.slane %v528, 4
      %v534 = vsel %vm385, %v529, %v530
      %v535 = vsel %vm485, %v520, %v534
      %v536 = vsel %vm385, %v530, %v531
      %v537 = vsel %vm485, %v522, %v536
      %v538 = vsel %vm385, %v531, %v532
      %v539 = vsel %vm485, %v524, %v538
      %v540 = vsel %vm385, %v532, %v533
      %v541 = vsel %vm485, %v526, %v540
      %547 = vst [vmem:[#allocation2 + $0x48] sm:$0xcc] %v535
      %548 = vst [vmem:[#allocation2 + $0x50] sm:$0xcc] %v537
      %549 = vst [vmem:[#allocation2 + $0x58] sm:$0xcc] %v539
      %550 = vst [vmem:[#allocation2 + $0x60] sm:$0xcc] %v541
      %551 = vst.msk [vmem:[#allocation2 + $0x68] sm:$0xc] %vm353, %v528
      %552 = vst [vmem:[#allocation1] ss:$2 sm:$0xff] %v300
      %s553 = scalar_lea.vmem [#allocation1], 16
      %554 = vst [vmem:[%s553] ss:$2 sm:$0xff] %v301
      %s555 = scalar_lea.vmem [#allocation1], 32
      %556 = vst [vmem:[%s555] ss:$2 sm:$0xff] %v302
      %v557 = vld.sshfl [vmem:[#allocation1] sm:$0xff pattern:$0x75643120]
      %v559 = vld.sshfl [vmem:[#allocation1 + $0x8] sm:$0xff pattern:$0x75643120]
      %v561 = vld.sshfl [vmem:[#allocation1 + $0x10] sm:$0xff pattern:$0x75643120]
      %v563 = vld.sshfl [vmem:[#allocation1 + $0x18] sm:$0xff pattern:$0x75643120]
      %v565 = vld.sshfl [vmem:[#allocation1 + $0x20] sm:$0xff pattern:$0x75643120]
      %567 = vrot.lane.b32.xlu0 %v557, 94
      %v568 = vpop.permute.xlu0 %567
      %569 = vrot.lane.b32.xlu0 %v559, 94
      %v570 = vpop.permute.xlu0 %569
      %571 = vrot.lane.b32.xlu0 %v561, 94
      %v572 = vpop.permute.xlu0 %571
      %573 = vrot.lane.b32.xlu0 %v563, 94
      %v574 = vpop.permute.xlu0 %573
      %575 = vrot.lane.b32.xlu0 %v565, 94
      %v576 = vpop.permute.xlu0 %575
      %v577 = vrot.slane %v568, 4
      %v578 = vrot.slane %v570, 4
      %v579 = vrot.slane %v572, 4
      %v580 = vrot.slane %v574, 4
      %v581 = vrot.slane %v576, 4
      %v582 = vsel %vm385, %v577, %v578
      %vm583 = vcmask 769024
      %v584 = vsel %vm583, %v568, %v582
      %v585 = vsel %vm385, %v578, %v579
      %v586 = vsel %vm583, %v570, %v585
      %v587 = vsel %vm385, %v579, %v580
      %v588 = vsel %vm583, %v572, %v587
      %v589 = vsel %vm385, %v580, %v581
      %v590 = vsel %vm583, %v574, %v589
      %596 = vst [vmem:[#allocation2 + $0x6c] sm:$0x33] %v584
      %597 = vst [vmem:[#allocation2 + $0x74] sm:$0x33] %v586
      %598 = vst [vmem:[#allocation2 + $0x7c] sm:$0x33] %v588
      %599 = vst [vmem:[#allocation2 + $0x84] sm:$0x33] %v590
      %600 = vst.msk [vmem:[#allocation2 + $0x8c] sm:$0x3] %vm328, %v576
      %s601 = scalar_lea.vmem [#allocation1], 1
      %602 = vst [vmem:[%s601] ss:$2 sm:$0xff] %v303
      %s603 = scalar_lea.vmem [#allocation1], 17
      %604 = vst [vmem:[%s603] ss:$2 sm:$0xff] %v304
      %s605 = scalar_lea.vmem [#allocation1], 33
      %606 = vst [vmem:[%s605] ss:$2 sm:$0xff] %v305
      %v607 = vld.sshfl [vmem:[#allocation1] sm:$0xff pattern:$0x75643120]
      %v609 = vld.sshfl [vmem:[#allocation1 + $0x8] sm:$0xff pattern:$0x75643120]
      %v611 = vld.sshfl [vmem:[#allocation1 + $0x10] sm:$0xff pattern:$0x75643120]
      %v613 = vld.sshfl [vmem:[#allocation1 + $0x18] sm:$0xff pattern:$0x75643120]
      %v615 = vld.sshfl [vmem:[#allocation1 + $0x20] sm:$0xff pattern:$0x75643120]
      %617 = vrot.lane.b32.xlu0 %v607, 94
      %v618 = vpop.permute.xlu0 %617
      %619 = vrot.lane.b32.xlu0 %v609, 94
      %v620 = vpop.permute.xlu0 %619
      %621 = vrot.lane.b32.xlu0 %v611, 94
      %v622 = vpop.permute.xlu0 %621
      %623 = vrot.lane.b32.xlu0 %v613, 94
      %v624 = vpop.permute.xlu0 %623
      %625 = vrot.lane.b32.xlu0 %v615, 94
      %v626 = vpop.permute.xlu0 %625
      %v627 = vrot.slane %v618, 4
      %v628 = vrot.slane %v620, 4
      %v629 = vrot.slane %v622, 4
      %v630 = vrot.slane %v624, 4
      %v631 = vrot.slane %v626, 4
      %v632 = vsel %vm385, %v627, %v628
      %v633 = vsel %vm583, %v618, %v632
      %v634 = vsel %vm385, %v628, %v629
      %v635 = vsel %vm583, %v620, %v634
      %v636 = vsel %vm385, %v629, %v630
      %v637 = vsel %vm583, %v622, %v636
      %v638 = vsel %vm385, %v630, %v631
      %v639 = vsel %vm583, %v624, %v638
      %645 = vst [vmem:[#allocation2 + $0x6c] sm:$0xcc] %v633
      %646 = vst [vmem:[#allocation2 + $0x74] sm:$0xcc] %v635
      %647 = vst [vmem:[#allocation2 + $0x7c] sm:$0xcc] %v637
      %648 = vst [vmem:[#allocation2 + $0x84] sm:$0xcc] %v639
      %649 = vst.msk [vmem:[#allocation2 + $0x8c] sm:$0xc] %vm353, %v626
      %650 = vst [vmem:[#allocation1] ss:$2 sm:$0xff] %v300
      %s651 = scalar_lea.vmem [#allocation1], 16
      %652 = vst [vmem:[%s651] ss:$2 sm:$0xff] %v301
      %s653 = scalar_lea.vmem [#allocation1], 32
      %654 = vst [vmem:[%s653] ss:$2 sm:$0xff] %v302
      %v655 = vld.sshfl [vmem:[#allocation1] sm:$0xff pattern:$0x75643120]
      %v657 = vld.sshfl [vmem:[#allocation1 + $0x8] sm:$0xff pattern:$0x75643120]
      %v659 = vld.sshfl [vmem:[#allocation1 + $0x10] sm:$0xff pattern:$0x75643120]
      %v661 = vld.sshfl [vmem:[#allocation1 + $0x18] sm:$0xff pattern:$0x75643120]
      %v663 = vld.sshfl [vmem:[#allocation1 + $0x20] sm:$0xff pattern:$0x75643120]
      %665 = vrot.lane.b32.xlu0 %v655, 93
      %v666 = vpop.permute.xlu0 %665
      %667 = vrot.lane.b32.xlu0 %v657, 93
      %v668 = vpop.permute.xlu0 %667
      %669 = vrot.lane.b32.xlu0 %v659, 93
      %v670 = vpop.permute.xlu0 %669
      %671 = vrot.lane.b32.xlu0 %v661, 93
      %v672 = vpop.permute.xlu0 %671
      %673 = vrot.lane.b32.xlu0 %v663, 93
      %v674 = vpop.permute.xlu0 %673
      %v675 = vrot.slane %v666, 4
      %v676 = vrot.slane %v668, 4
      %v677 = vrot.slane %v670, 4
      %v678 = vrot.slane %v672, 4
      %v679 = vrot.slane %v674, 4
      %v680 = vsel %vm385, %v675, %v676
      %vm681 = vcmask 760832
      %v682 = vsel %vm681, %v666, %v680
      %v683 = vsel %vm385, %v676, %v677
      %v684 = vsel %vm681, %v668, %v683
      %v685 = vsel %vm385, %v677, %v678
      %v686 = vsel %vm681, %v670, %v685
      %v687 = vsel %vm385, %v678, %v679
      %v688 = vsel %vm681, %v672, %v687
      %694 = vst [vmem:[#allocation2 + $0x90] sm:$0x33] %v682
      %695 = vst [vmem:[#allocation2 + $0x98] sm:$0x33] %v684
      %696 = vst [vmem:[#allocation2 + $0xa0] sm:$0x33] %v686
      %697 = vst [vmem:[#allocation2 + $0xa8] sm:$0x33] %v688
      %698 = vst.msk [vmem:[#allocation2 + $0xb0] sm:$0x3] %vm328, %v674
      %s699 = scalar_lea.vmem [#allocation1], 1
      %700 = vst [vmem:[%s699] ss:$2 sm:$0xff] %v303
      %s701 = scalar_lea.vmem [#allocation1], 17
      %702 = vst [vmem:[%s701] ss:$2 sm:$0xff] %v304
      %s703 = scalar_lea.vmem [#allocation1], 33
      %704 = vst [vmem:[%s703] ss:$2 sm:$0xff] %v305
      %v705 = vld.sshfl [vmem:[#allocation1] sm:$0xff pattern:$0x75643120]
      %v707 = vld.sshfl [vmem:[#allocation1 + $0x8] sm:$0xff pattern:$0x75643120]
      %v709 = vld.sshfl [vmem:[#allocation1 + $0x10] sm:$0xff pattern:$0x75643120]
      %v711 = vld.sshfl [vmem:[#allocation1 + $0x18] sm:$0xff pattern:$0x75643120]
      %v713 = vld.sshfl [vmem:[#allocation1 + $0x20] sm:$0xff pattern:$0x75643120]
      %715 = vrot.lane.b32.xlu0 %v705, 93
      %v716 = vpop.permute.xlu0 %715
      %717 = vrot.lane.b32.xlu0 %v707, 93
      %v718 = vpop.permute.xlu0 %717
      %719 = vrot.lane.b32.xlu0 %v709, 93
      %v720 = vpop.permute.xlu0 %719
      %721 = vrot.lane.b32.xlu0 %v711, 93
      %v722 = vpop.permute.xlu0 %721
      %723 = vrot.lane.b32.xlu0 %v713, 93
      %v724 = vpop.permute.xlu0 %723
      %v725 = vrot.slane %v716, 4
      %v726 = vrot.slane %v718, 4
      %v727 = vrot.slane %v720, 4
      %v728 = vrot.slane %v722, 4
      %v729 = vrot.slane %v724, 4
      %v730 = vsel %vm385, %v725, %v726
      %v731 = vsel %vm681, %v716, %v730
      %v732 = vsel %vm385, %v726, %v727
      %v733 = vsel %vm681, %v718, %v732
      %v734 = vsel %vm385, %v727, %v728
      %v735 = vsel %vm681, %v720, %v734
      %v736 = vsel %vm385, %v728, %v729
      %v737 = vsel %vm681, %v722, %v736
      %743 = vst [vmem:[#allocation2 + $0x90] sm:$0xcc] %v731
      %744 = vst [vmem:[#allocation2 + $0x98] sm:$0xcc] %v733
      %745 = vst [vmem:[#allocation2 + $0xa0] sm:$0xcc] %v735
      %746 = vst [vmem:[#allocation2 + $0xa8] sm:$0xcc] %v737
      %747 = vst.msk [vmem:[#allocation2 + $0xb0] sm:$0xc] %vm353, %v724
      %748 = vst [vmem:[#allocation1] ss:$2 sm:$0xff] %v300
      %s749 = scalar_lea.vmem [#allocation1], 16
      %750 = vst [vmem:[%s749] ss:$2 sm:$0xff] %v301
      %s751 = scalar_lea.vmem [#allocation1], 32
      %752 = vst [vmem:[%s751] ss:$2 sm:$0xff] %v302
      %v753 = vld.sshfl [vmem:[#allocation1] sm:$0xff pattern:$0x75643120]
      %v755 = vld.sshfl [vmem:[#allocation1 + $0x8] sm:$0xff pattern:$0x75643120]
      %v757 = vld.sshfl [vmem:[#allocation1 + $0x10] sm:$0xff pattern:$0x75643120]
      %v759 = vld.sshfl [vmem:[#allocation1 + $0x18] sm:$0xff pattern:$0x75643120]
      %v761 = vld.sshfl [vmem:[#allocation1 + $0x20] sm:$0xff pattern:$0x75643120]
      %763 = vrot.lane.b32.xlu0 %v753, 92
      %v764 = vpop.permute.xlu0 %763
      %765 = vrot.lane.b32.xlu0 %v755, 92
      %v766 = vpop.permute.xlu0 %765
      %767 = vrot.lane.b32.xlu0 %v757, 92
      %v768 = vpop.permute.xlu0 %767
      %769 = vrot.lane.b32.xlu0 %v759, 92
      %v770 = vpop.permute.xlu0 %769
      %771 = vrot.lane.b32.xlu0 %v761, 92
      %v772 = vpop.permute.xlu0 %771
      %v773 = vrot.slane %v764, 4
      %v774 = vrot.slane %v766, 4
      %v775 = vrot.slane %v768, 4
      %v776 = vrot.slane %v770, 4
      %v777 = vrot.slane %v772, 4
      %v778 = vsel %vm385, %v773, %v774
      %vm779 = vcmask 752640
      %v780 = vsel %vm779, %v764, %v778
      %v781 = vsel %vm385, %v774, %v775
      %v782 = vsel %vm779, %v766, %v781
      %v783 = vsel %vm385, %v775, %v776
      %v784 = vsel %vm779, %v768, %v783
      %v785 = vsel %vm385, %v776, %v777
      %v786 = vsel %vm779, %v770, %v785
      %792 = vst [vmem:[#allocation2 + $0xb4] sm:$0x33] %v780
      %793 = vst [vmem:[#allocation2 + $0xbc] sm:$0x33] %v782
      %794 = vst [vmem:[#allocation2 + $0xc4] sm:$0x33] %v784
      %795 = vst [vmem:[#allocation2 + $0xcc] sm:$0x33] %v786
      %796 = vst.msk [vmem:[#allocation2 + $0xd4] sm:$0x3] %vm328, %v772
      %s797 = scalar_lea.vmem [#allocation1], 1
      %798 = vst [vmem:[%s797] ss:$2 sm:$0xff] %v303
      %s799 = scalar_lea.vmem [#allocation1], 17
      %800 = vst [vmem:[%s799] ss:$2 sm:$0xff] %v304
      %s801 = scalar_lea.vmem [#allocation1], 33
      %802 = vst [vmem:[%s801] ss:$2 sm:$0xff] %v305
      %v803 = vld.sshfl [vmem:[#allocation1] sm:$0xff pattern:$0x75643120]
      %v805 = vld.sshfl [vmem:[#allocation1 + $0x8] sm:$0xff pattern:$0x75643120]
      %v807 = vld.sshfl [vmem:[#allocation1 + $0x10] sm:$0xff pattern:$0x75643120]
      %v809 = vld.sshfl [vmem:[#allocation1 + $0x18] sm:$0xff pattern:$0x75643120]
      %v811 = vld.sshfl [vmem:[#allocation1 + $0x20] sm:$0xff pattern:$0x75643120]
      %813 = vrot.lane.b32.xlu0 %v803, 92
      %v814 = vpop.permute.xlu0 %813
      %815 = vrot.lane.b32.xlu0 %v805, 92
      %v816 = vpop.permute.xlu0 %815
      %817 = vrot.lane.b32.xlu0 %v807, 92
      %v818 = vpop.permute.xlu0 %817
      %819 = vrot.lane.b32.xlu0 %v809, 92
      %v820 = vpop.permute.xlu0 %819
      %821 = vrot.lane.b32.xlu0 %v811, 92
      %v822 = vpop.permute.xlu0 %821
      %v823 = vrot.slane %v814, 4
      %v824 = vrot.slane %v816, 4
      %v825 = vrot.slane %v818, 4
      %v826 = vrot.slane %v820, 4
      %v827 = vrot.slane %v822, 4
      %v828 = vsel %vm385, %v823, %v824
      %v829 = vsel %vm779, %v814, %v828
      %v830 = vsel %vm385, %v824, %v825
      %v831 = vsel %vm779, %v816, %v830
      %v832 = vsel %vm385, %v825, %v826
      %v833 = vsel %vm779, %v818, %v832
      %v834 = vsel %vm385, %v826, %v827
      %v835 = vsel %vm779, %v820, %v834
      %841 = vst [vmem:[#allocation2 + $0xb4] sm:$0xcc] %v829
      %842 = vst [vmem:[#allocation2 + $0xbc] sm:$0xcc] %v831
      %843 = vst [vmem:[#allocation2 + $0xc4] sm:$0xcc] %v833
      %844 = vst [vmem:[#allocation2 + $0xcc] sm:$0xcc] %v835
      %845 = vst.msk [vmem:[#allocation2 + $0xd4] sm:$0xc] %vm353, %v822
      %846 = vst [vmem:[#allocation1] ss:$2 sm:$0xff] %v300
      %s847 = scalar_lea.vmem [#allocation1], 16
      %848 = vst [vmem:[%s847] ss:$2 sm:$0xff] %v301
      %s849 = scalar_lea.vmem [#allocation1], 32
      %850 = vst [vmem:[%s849] ss:$2 sm:$0xff] %v302
      %v851 = vld.sshfl [vmem:[#allocation1] sm:$0xff pattern:$0x75643120]
      %v853 = vld.sshfl [vmem:[#allocation1 + $0x8] sm:$0xff pattern:$0x75643120]
      %v855 = vld.sshfl [vmem:[#allocation1 + $0x10] sm:$0xff pattern:$0x75643120]
      %v857 = vld.sshfl [vmem:[#allocation1 + $0x18] sm:$0xff pattern:$0x75643120]
      %v859 = vld.sshfl [vmem:[#allocation1 + $0x20] sm:$0xff pattern:$0x75643120]
      %861 = vrot.lane.b32.xlu0 %v851, 60
      %v862 = vpop.permute.xlu0 %861
      %863 = vrot.lane.b32.xlu0 %v853, 60
      %v864 = vpop.permute.xlu0 %863
      %865 = vrot.lane.b32.xlu0 %v855, 60
      %v866 = vpop.permute.xlu0 %865
      %867 = vrot.lane.b32.xlu0 %v857, 60
      %v868 = vpop.permute.xlu0 %867
      %869 = vrot.lane.b32.xlu0 %v859, 60
      %v870 = vpop.permute.xlu0 %869
      %v871 = vrot.slane %v862, 4
      %v872 = vrot.slane %v864, 4
      %v873 = vrot.slane %v866, 4
      %v874 = vrot.slane %v868, 4
      %v875 = vrot.slane %v870, 4
      %v876 = vsel %vm385, %v871, %v872
      %vm877 = vcmask 490496
      %v878 = vsel %vm877, %v862, %v876
      %v879 = vsel %vm385, %v872, %v873
      %v880 = vsel %vm877, %v864, %v879
      %v881 = vsel %vm385, %v873, %v874
      %v882 = vsel %vm877, %v866, %v881
      %v883 = vsel %vm385, %v874, %v875
      %v884 = vsel %vm877, %v868, %v883
      %v885 = vsel %vm877, %v870, %v875
      %891 = vst [vmem:[#allocation2 + $0xd8] sm:$0x33] %v878
      %892 = vst [vmem:[#allocation2 + $0xe0] sm:$0x33] %v880
      %893 = vst [vmem:[#allocation2 + $0xe8] sm:$0x33] %v882
      %894 = vst [vmem:[#allocation2 + $0xf0] sm:$0x33] %v884
      %895 = vst.msk [vmem:[#allocation2 + $0xf8] sm:$0x3] %vm328, %v885
      %s896 = scalar_lea.vmem [#allocation1], 1
      %897 = vst [vmem:[%s896] ss:$2 sm:$0xff] %v303
      %s898 = scalar_lea.vmem [#allocation1], 17
      %899 = vst [vmem:[%s898] ss:$2 sm:$0xff] %v304
      %s900 = scalar_lea.vmem [#allocation1], 33
      %901 = vst [vmem:[%s900] ss:$2 sm:$0xff] %v305
      %v902 = vld.sshfl [vmem:[#allocation1] sm:$0xff pattern:$0x75643120]
      %v904 = vld.sshfl [vmem:[#allocation1 + $0x8] sm:$0xff pattern:$0x75643120]
      %v906 = vld.sshfl [vmem:[#allocation1 + $0x10] sm:$0xff pattern:$0x75643120]
      %v908 = vld.sshfl [vmem:[#allocation1 + $0x18] sm:$0xff pattern:$0x75643120]
      %v910 = vld.sshfl [vmem:[#allocation1 + $0x20] sm:$0xff pattern:$0x75643120]
      %912 = vrot.lane.b32.xlu0 %v902, 60
      %v913 = vpop.permute.xlu0 %912
      %914 = vrot.lane.b32.xlu0 %v904, 60
      %v915 = vpop.permute.xlu0 %914
      %916 = vrot.lane.b32.xlu0 %v906, 60
      %v917 = vpop.permute.xlu0 %916
      %918 = vrot.lane.b32.xlu0 %v908, 60
      %v919 = vpop.permute.xlu0 %918
      %920 = vrot.lane.b32.xlu0 %v910, 60
      %v921 = vpop.permute.xlu0 %920
      %v922 = vrot.slane %v913, 4
      %v923 = vrot.slane %v915, 4
      %v924 = vrot.slane %v917, 4
      %v925 = vrot.slane %v919, 4
      %v926 = vrot.slane %v921, 4
      %v927 = vsel %vm385, %v922, %v923
      %v928 = vsel %vm877, %v913, %v927
      %v929 = vsel %vm385, %v923, %v924
      %v930 = vsel %vm877, %v915, %v929
      %v931 = vsel %vm385, %v924, %v925
      %v932 = vsel %vm877, %v917, %v931
      %v933 = vsel %vm385, %v925, %v926
      %v934 = vsel %vm877, %v919, %v933
      %v935 = vsel %vm877, %v921, %v926
      %941 = vst [vmem:[#allocation2 + $0xd8] sm:$0xcc] %v928
      %942 = vst [vmem:[#allocation2 + $0xe0] sm:$0xcc] %v930
      %943 = vst [vmem:[#allocation2 + $0xe8] sm:$0xcc] %v932
      %944 = vst [vmem:[#allocation2 + $0xf0] sm:$0xcc] %v934
      %945 = vst.msk [vmem:[#allocation2 + $0xf8] sm:$0xc] %vm353, %v935
      %946 = vst [vmem:[#allocation1] ss:$2 sm:$0xff] %v300
      %s947 = scalar_lea.vmem [#allocation1], 16
      %948 = vst [vmem:[%s947] ss:$2 sm:$0xff] %v301
      %s949 = scalar_lea.vmem [#allocation1], 32
      %950 = vst [vmem:[%s949] ss:$2 sm:$0xff] %v302
      %v951 = vld.sshfl [vmem:[#allocation1] sm:$0xff pattern:$0x75643120]
      %v953 = vld.sshfl [vmem:[#allocation1 + $0x8] sm:$0xff pattern:$0x75643120]
      %v955 = vld.sshfl [vmem:[#allocation1 + $0x10] sm:$0xff pattern:$0x75643120]
      %v957 = vld.sshfl [vmem:[#allocation1 + $0x18] sm:$0xff pattern:$0x75643120]
      %v959 = vld.sshfl [vmem:[#allocation1 + $0x20] sm:$0xff pattern:$0x75643120]
      %961 = vrot.lane.b32.xlu0 %v951, 59
      %v962 = vpop.permute.xlu0 %961
      %963 = vrot.lane.b32.xlu0 %v953, 59
      %v964 = vpop.permute.xlu0 %963
      %965 = vrot.lane.b32.xlu0 %v955, 59
      %v966 = vpop.permute.xlu0 %965
      %967 = vrot.lane.b32.xlu0 %v957, 59
      %v968 = vpop.permute.xlu0 %967
      %969 = vrot.lane.b32.xlu0 %v959, 59
      %v970 = vpop.permute.xlu0 %969
      %v971 = vrot.slane %v962, 4
      %v972 = vrot.slane %v964, 4
      %v973 = vrot.slane %v966, 4
      %v974 = vrot.slane %v968, 4
      %v975 = vrot.slane %v970, 4
      %v976 = vsel %vm385, %v971, %v972
      %vm977 = vcmask 482304
      %v978 = vsel %vm977, %v962, %v976
      %v979 = vsel %vm385, %v972, %v973
      %v980 = vsel %vm977, %v964, %v979
      %v981 = vsel %vm385, %v973, %v974
      %v982 = vsel %vm977, %v966, %v981
      %v983 = vsel %vm385, %v974, %v975
      %v984 = vsel %vm977, %v968, %v983
      %v985 = vsel %vm977, %v970, %v975
      %991 = vst [vmem:[#allocation2 + $0xfc] sm:$0x33] %v978
      %992 = vst [vmem:[#allocation2 + $0x104] sm:$0x33] %v980
      %993 = vst [vmem:[#allocation2 + $0x10c] sm:$0x33] %v982
      %994 = vst [vmem:[#allocation2 + $0x114] sm:$0x33] %v984
      %995 = vst.msk [vmem:[#allocation2 + $0x11c] sm:$0x3] %vm328, %v985
      %s996 = scalar_lea.vmem [#allocation1], 1
      %997 = vst [vmem:[%s996] ss:$2 sm:$0xff] %v303
      %s998 = scalar_lea.vmem [#allocation1], 17
      %999 = vst [vmem:[%s998] ss:$2 sm:$0xff] %v304
      %s1000 = scalar_lea.vmem [#allocation1], 33
      %1001 = vst [vmem:[%s1000] ss:$2 sm:$0xff] %v305
      %v1002 = vld.sshfl [vmem:[#allocation1] sm:$0xff pattern:$0x75643120]
      %v1004 = vld.sshfl [vmem:[#allocation1 + $0x8] sm:$0xff pattern:$0x75643120]
      %v1006 = vld.sshfl [vmem:[#allocation1 + $0x10] sm:$0xff pattern:$0x75643120]
      %v1008 = vld.sshfl [vmem:[#allocation1 + $0x18] sm:$0xff pattern:$0x75643120]
      %v1010 = vld.sshfl [vmem:[#allocation1 + $0x20] sm:$0xff pattern:$0x75643120]
      %1012 = vrot.lane.b32.xlu0 %v1002, 59
      %v1013 = vpop.permute.xlu0 %1012
      %1014 = vrot.lane.b32.xlu0 %v1004, 59
      %v1015 = vpop.permute.xlu0 %1014
      %1016 = vrot.lane.b32.xlu0 %v1006, 59
      %v1017 = vpop.permute.xlu0 %1016
      %1018 = vrot.lane.b32.xlu0 %v1008, 59
      %v1019 = vpop.permute.xlu0 %1018
      %1020 = vrot.lane.b32.xlu0 %v1010, 59
      %v1021 = vpop.permute.xlu0 %1020
      %v1022 = vrot.slane %v1013, 4
      %v1023 = vrot.slane %v1015, 4
      %v1024 = vrot.slane %v1017, 4
      %v1025 = vrot.slane %v1019, 4
      %v1026 = vrot.slane %v1021, 4
      %v1027 = vsel %vm385, %v1022, %v1023
      %v1028 = vsel %vm977, %v1013, %v1027
      %v1029 = vsel %vm385, %v1023, %v1024
      %v1030 = vsel %vm977, %v1015, %v1029
      %v1031 = vsel %vm385, %v1024, %v1025
      %v1032 = vsel %vm977, %v1017, %v1031
      %v1033 = vsel %vm385, %v1025, %v1026
      %v1034 = vsel %vm977, %v1019, %v1033
      %v1035 = vsel %vm977, %v1021, %v1026
      %1041 = vst [vmem:[#allocation2 + $0xfc] sm:$0xcc] %v1028
      %1042 = vst [vmem:[#allocation2 + $0x104] sm:$0xcc] %v1030
      %1043 = vst [vmem:[#allocation2 + $0x10c] sm:$0xcc] %v1032
      %1044 = vst [vmem:[#allocation2 + $0x114] sm:$0xcc] %v1034
      %1045 = vst.msk [vmem:[#allocation2 + $0x11c] sm:$0xc] %vm353, %v1035
      %1046 = vst [vmem:[#allocation1] ss:$2 sm:$0xff] %v300
      %s1047 = scalar_lea.vmem [#allocation1], 16
      %1048 = vst [vmem:[%s1047] ss:$2 sm:$0xff] %v301
      %s1049 = scalar_lea.vmem [#allocation1], 32
      %1050 = vst [vmem:[%s1049] ss:$2 sm:$0xff] %v302
      %v1051 = vld.sshfl [vmem:[#allocation1] sm:$0xff pattern:$0x75643120]
      %v1053 = vld.sshfl [vmem:[#allocation1 + $0x8] sm:$0xff pattern:$0x75643120]
      %v1055 = vld.sshfl [vmem:[#allocation1 + $0x10] sm:$0xff pattern:$0x75643120]
      %v1057 = vld.sshfl [vmem:[#allocation1 + $0x18] sm:$0xff pattern:$0x75643120]
      %v1059 = vld.sshfl [vmem:[#allocation1 + $0x20] sm:$0xff pattern:$0x75643120]
      %1061 = vrot.lane.b32.xlu0 %v1051, 58
      %v1062 = vpop.permute.xlu0 %1061
      %1063 = vrot.lane.b32.xlu0 %v1053, 58
      %v1064 = vpop.permute.xlu0 %1063
      %1065 = vrot.lane.b32.xlu0 %v1055, 58
      %v1066 = vpop.permute.xlu0 %1065
      %1067 = vrot.lane.b32.xlu0 %v1057, 58
      %v1068 = vpop.permute.xlu0 %1067
      %1069 = vrot.lane.b32.xlu0 %v1059, 58
      %v1070 = vpop.permute.xlu0 %1069
      %v1071 = vrot.slane %v1062, 4
      %v1072 = vrot.slane %v1064, 4
      %v1073 = vrot.slane %v1066, 4
      %v1074 = vrot.slane %v1068, 4
      %v1075 = vrot.slane %v1070, 4
      %v1076 = vsel %vm385, %v1071, %v1072
      %vm1077 = vcmask 474112
      %v1078 = vsel %vm1077, %v1062, %v1076
      %v1079 = vsel %vm385, %v1072, %v1073
      %v1080 = vsel %vm1077, %v1064, %v1079
      %v1081 = vsel %vm385, %v1073, %v1074
      %v1082 = vsel %vm1077, %v1066, %v1081
      %v1083 = vsel %vm385, %v1074, %v1075
      %v1084 = vsel %vm1077, %v1068, %v1083
      %v1085 = vsel %vm1077, %v1070, %v1075
      %1091 = vst [vmem:[#allocation2 + $0x120] sm:$0x33] %v1078
      %1092 = vst [vmem:[#allocation2 + $0x128] sm:$0x33] %v1080
      %1093 = vst [vmem:[#allocation2 + $0x130] sm:$0x33] %v1082
      %1094 = vst [vmem:[#allocation2 + $0x138] sm:$0x33] %v1084
      %1095 = vst.msk [vmem:[#allocation2 + $0x140] sm:$0x3] %vm328, %v1085
      %s1096 = scalar_lea.vmem [#allocation1], 1
      %1097 = vst [vmem:[%s1096] ss:$2 sm:$0xff] %v303
      %s1098 = scalar_lea.vmem [#allocation1], 17
      %1099 = vst [vmem:[%s1098] ss:$2 sm:$0xff] %v304
      %s1100 = scalar_lea.vmem [#allocation1], 33
      %1101 = vst [vmem:[%s1100] ss:$2 sm:$0xff] %v305
      %v1102 = vld.sshfl [vmem:[#allocation1] sm:$0xff pattern:$0x75643120]
      %v1104 = vld.sshfl [vmem:[#allocation1 + $0x8] sm:$0xff pattern:$0x75643120]
      %v1106 = vld.sshfl [vmem:[#allocation1 + $0x10] sm:$0xff pattern:$0x75643120]
      %v1108 = vld.sshfl [vmem:[#allocation1 + $0x18] sm:$0xff pattern:$0x75643120]
      %v1110 = vld.sshfl [vmem:[#allocation1 + $0x20] sm:$0xff pattern:$0x75643120]
      %1112 = vrot.lane.b32.xlu0 %v1102, 58
      %v1113 = vpop.permute.xlu0 %1112
      %1114 = vrot.lane.b32.xlu0 %v1104, 58
      %v1115 = vpop.permute.xlu0 %1114
      %1116 = vrot.lane.b32.xlu0 %v1106, 58
      %v1117 = vpop.permute.xlu0 %1116
      %1118 = vrot.lane.b32.xlu0 %v1108, 58
      %v1119 = vpop.permute.xlu0 %1118
      %1120 = vrot.lane.b32.xlu0 %v1110, 58
      %v1121 = vpop.permute.xlu0 %1120
      %v1122 = vrot.slane %v1113, 4
      %v1123 = vrot.slane %v1115, 4
      %v1124 = vrot.slane %v1117, 4
      %v1125 = vrot.slane %v1119, 4
      %v1126 = vrot.slane %v1121, 4
      %v1127 = vsel %vm385, %v1122, %v1123
      %v1128 = vsel %vm1077, %v1113, %v1127
      %v1129 = vsel %vm385, %v1123, %v1124
      %v1130 = vsel %vm1077, %v1115, %v1129
      %v1131 = vsel %vm385, %v1124, %v1125
      %v1132 = vsel %vm1077, %v1117, %v1131
      %v1133 = vsel %vm385, %v1125, %v1126
      %v1134 = vsel %vm1077, %v1119, %v1133
      %v1135 = vsel %vm1077, %v1121, %v1126
      %1141 = vst [vmem:[#allocation2 + $0x120] sm:$0xcc] %v1128
      %1142 = vst [vmem:[#allocation2 + $0x128] sm:$0xcc] %v1130
      %1143 = vst [vmem:[#allocation2 + $0x130] sm:$0xcc] %v1132
      %1144 = vst [vmem:[#allocation2 + $0x138] sm:$0xcc] %v1134
      %1145 = vst.msk [vmem:[#allocation2 + $0x140] sm:$0xc] %vm353, %v1135
      %v1146 = vld [vmem:[%s2] sm:$0xf]
      %v1147 = vld [vmem:[#allocation2] sm:$0xff]
      %v1148 = vld [vmem:[#allocation2 + $0x8] sm:$0xff]
      %v1149 = vld [vmem:[#allocation2 + $0x10] sm:$0xff]
      %v1150 = vld [vmem:[#allocation2 + $0x18] sm:$0xff]
      %v1151 = vld [vmem:[#allocation2 + $0x20] sm:$0xf]
      %v1152 = vld [vmem:[#allocation2 + $0x24] sm:$0xff]
      %v1153 = vld [vmem:[#allocation2 + $0x2c] sm:$0xff]
      %v1154 = vld [vmem:[#allocation2 + $0x34] sm:$0xff]
      %v1155 = vld [vmem:[#allocation2 + $0x3c] sm:$0xff]
      %v1156 = vld [vmem:[#allocation2 + $0x44] sm:$0xf]
      %v1157 = vld [vmem:[#allocation2 + $0x48] sm:$0xff]
      %v1158 = vld [vmem:[#allocation2 + $0x50] sm:$0xff]
      %v1159 = vld [vmem:[#allocation2 + $0x58] sm:$0xff]
      %v1160 = vld [vmem:[#allocation2 + $0x60] sm:$0xff]
      %v1161 = vld [vmem:[#allocation2 + $0x68] sm:$0xf]
      %v1162 = vld [vmem:[#allocation2 + $0x6c] sm:$0xff]
      %v1163 = vld [vmem:[#allocation2 + $0x74] sm:$0xff]
      %v1164 = vld [vmem:[#allocation2 + $0x7c] sm:$0xff]
      %v1165 = vld [vmem:[#allocation2 + $0x84] sm:$0xff]
      %v1166 = vld [vmem:[#allocation2 + $0x8c] sm:$0xf]
      %v1167 = vld [vmem:[#allocation2 + $0x90] sm:$0xff]
      %v1168 = vld [vmem:[#allocation2 + $0x98] sm:$0xff]
      %v1169 = vld [vmem:[#allocation2 + $0xa0] sm:$0xff]
      %v1170 = vld [vmem:[#allocation2 + $0xa8] sm:$0xff]
      %v1171 = vld [vmem:[#allocation2 + $0xb0] sm:$0xf]
      %v1172 = vld [vmem:[#allocation2 + $0xb4] sm:$0xff]
      %v1173 = vld [vmem:[#allocation2 + $0xbc] sm:$0xff]
      %v1174 = vld [vmem:[#allocation2 + $0xc4] sm:$0xff]
      %v1175 = vld [vmem:[#allocation2 + $0xcc] sm:$0xff]
      %v1176 = vld [vmem:[#allocation2 + $0xd4] sm:$0xf]
      %v1177 = vld [vmem:[#allocation2 + $0xd8] sm:$0xff]
      %v1178 = vld [vmem:[#allocation2 + $0xe0] sm:$0xff]
      %v1179 = vld [vmem:[#allocation2 + $0xe8] sm:$0xff]
      %v1180 = vld [vmem:[#allocation2 + $0xf0] sm:$0xff]
      %v1181 = vld [vmem:[#allocation2 + $0xf8] sm:$0xf]
      %v1182 = vld [vmem:[#allocation2 + $0xfc] sm:$0xff]
      %v1183 = vld [vmem:[#allocation2 + $0x104] sm:$0xff]
      %v1184 = vld [vmem:[#allocation2 + $0x10c] sm:$0xff]
      %v1185 = vld [vmem:[#allocation2 + $0x114] sm:$0xff]
      %v1186 = vld [vmem:[#allocation2 + $0x11c] sm:$0xf]
      %v1187 = vld [vmem:[#allocation2 + $0x120] sm:$0xff]
      %v1188 = vld [vmem:[#allocation2 + $0x128] sm:$0xff]
      %v1189 = vld [vmem:[#allocation2 + $0x130] sm:$0xff]
      %v1190 = vld [vmem:[#allocation2 + $0x138] sm:$0xff]
      %v1191 = vld [vmem:[#allocation2 + $0x140] sm:$0xf]
      %v1192 = vld [vmem:[%s3] sm:$0xff]
      %1194 = vset.pattern.permute.xlu0 0
      %1195 = vperm.xlu0 %1194, %v1192
      %v1196 = vpop.permute.xlu0 %1195
      %v1243 = vunpack.c.l.b16 %v1147
      %v1244 = vunpack.c.h.b16 %v1147
      %v1245 = vunpack.c.l.b16 %v1148
      %v1246 = vunpack.c.h.b16 %v1148
      %v1247 = vunpack.c.l.b16 %v1149
      %v1248 = vunpack.c.h.b16 %v1149
      %v1249 = vunpack.c.l.b16 %v1150
      %v1250 = vunpack.c.h.b16 %v1150
      %v1251 = vunpack.c.l.b16 %v1151
      %v1252 = vunpack.c.l.b16 %v1152
      %v1253 = vunpack.c.h.b16 %v1152
      %v1254 = vunpack.c.l.b16 %v1153
      %v1255 = vunpack.c.h.b16 %v1153
      %v1256 = vunpack.c.l.b16 %v1154
      %v1257 = vunpack.c.h.b16 %v1154
      %v1258 = vunpack.c.l.b16 %v1155
      %v1259 = vunpack.c.h.b16 %v1155
      %v1260 = vunpack.c.l.b16 %v1156
      %v1261 = vunpack.c.l.b16 %v1157
      %v1262 = vunpack.c.h.b16 %v1157
      %v1263 = vunpack.c.l.b16 %v1158
      %v1264 = vunpack.c.h.b16 %v1158
      %v1265 = vunpack.c.l.b16 %v1159
      %v1266 = vunpack.c.h.b16 %v1159
      %v1267 = vunpack.c.l.b16 %v1160
      %v1268 = vunpack.c.h.b16 %v1160
      %v1269 = vunpack.c.l.b16 %v1161
      %v1270 = vunpack.c.l.b16 %v1162
      %v1271 = vunpack.c.h.b16 %v1162
      %v1272 = vunpack.c.l.b16 %v1163
      %v1273 = vunpack.c.h.b16 %v1163
      %v1274 = vunpack.c.l.b16 %v1164
      %v1275 = vunpack.c.h.b16 %v1164
      %v1276 = vunpack.c.l.b16 %v1165
      %v1277 = vunpack.c.h.b16 %v1165
      %v1278 = vunpack.c.l.b16 %v1166
      %v1279 = vunpack.c.l.b16 %v1167
      %v1280 = vunpack.c.h.b16 %v1167
      %v1281 = vunpack.c.l.b16 %v1168
      %v1282 = vunpack.c.h.b16 %v1168
      %v1283 = vunpack.c.l.b16 %v1169
      %v1284 = vunpack.c.h.b16 %v1169
      %v1285 = vunpack.c.l.b16 %v1170
      %v1286 = vunpack.c.h.b16 %v1170
      %v1287 = vunpack.c.l.b16 %v1171
      %v1288 = vunpack.c.l.b16 %v1172
      %v1289 = vunpack.c.h.b16 %v1172
      %v1290 = vunpack.c.l.b16 %v1173
      %v1291 = vunpack.c.h.b16 %v1173
      %v1292 = vunpack.c.l.b16 %v1174
      %v1293 = vunpack.c.h.b16 %v1174
      %v1294 = vunpack.c.l.b16 %v1175
      %v1295 = vunpack.c.h.b16 %v1175
      %v1296 = vunpack.c.l.b16 %v1176
      %v1297 = vunpack.c.l.b16 %v1177
      %v1298 = vunpack.c.h.b16 %v1177
      %v1299 = vunpack.c.l.b16 %v1178
      %v1300 = vunpack.c.h.b16 %v1178
      %v1301 = vunpack.c.l.b16 %v1179
      %v1302 = vunpack.c.h.b16 %v1179
      %v1303 = vunpack.c.l.b16 %v1180
      %v1304 = vunpack.c.h.b16 %v1180
      %v1305 = vunpack.c.l.b16 %v1181
      %v1306 = vunpack.c.l.b16 %v1182
      %v1307 = vunpack.c.h.b16 %v1182
      %v1308 = vunpack.c.l.b16 %v1183
      %v1309 = vunpack.c.h.b16 %v1183
      %v1310 = vunpack.c.l.b16 %v1184
      %v1311 = vunpack.c.h.b16 %v1184
      %v1312 = vunpack.c.l.b16 %v1185
      %v1313 = vunpack.c.h.b16 %v1185
      %v1314 = vunpack.c.l.b16 %v1186
      %v1315 = vunpack.c.l.b16 %v1187
      %v1316 = vunpack.c.h.b16 %v1187
      %v1317 = vunpack.c.l.b16 %v1188
      %v1318 = vunpack.c.h.b16 %v1188
      %v1319 = vunpack.c.l.b16 %v1189
      %v1320 = vunpack.c.h.b16 %v1189
      %v1321 = vunpack.c.l.b16 %v1190
      %v1322 = vunpack.c.h.b16 %v1190
      %v1323 = vunpack.c.l.b16 %v1191
      %v1324 = vpack.c.b16 %v1252, %v1243
      %v1325 = vpack.c.b16 %v1253, %v1244
      %v1326 = vpack.c.b16 %v1254, %v1245
      %v1327 = vpack.c.b16 %v1255, %v1246
      %v1328 = vpack.c.b16 %v1256, %v1247
      %v1329 = vpack.c.b16 %v1257, %v1248
      %v1330 = vpack.c.b16 %v1258, %v1249
      %v1331 = vpack.c.b16 %v1259, %v1250
      %v1332 = vpack.c.b16 %v1260, %v1251
      %v1333 = vpack.c.b16 %v1270, %v1261
      %v1334 = vpack.c.b16 %v1271, %v1262
      %v1335 = vpack.c.b16 %v1272, %v1263
      %v1336 = vpack.c.b16 %v1273, %v1264
      %v1337 = vpack.c.b16 %v1274, %v1265
      %v1338 = vpack.c.b16 %v1275, %v1266
      %v1339 = vpack.c.b16 %v1276, %v1267
      %v1340 = vpack.c.b16 %v1277, %v1268
      %v1341 = vpack.c.b16 %v1278, %v1269
      %v1342 = vpack.c.b16 %v1288, %v1279
      %v1343 = vpack.c.b16 %v1289, %v1280
      %v1344 = vpack.c.b16 %v1290, %v1281
      %v1345 = vpack.c.b16 %v1291, %v1282
      %v1346 = vpack.c.b16 %v1292, %v1283
      %v1347 = vpack.c.b16 %v1293, %v1284
      %v1348 = vpack.c.b16 %v1294, %v1285
      %v1349 = vpack.c.b16 %v1295, %v1286
      %v1350 = vpack.c.b16 %v1296, %v1287
      %v1351 = vpack.c.b16 %v1306, %v1297
      %v1352 = vpack.c.b16 %v1307, %v1298
      %v1353 = vpack.c.b16 %v1308, %v1299
      %v1354 = vpack.c.b16 %v1309, %v1300
      %v1355 = vpack.c.b16 %v1310, %v1301
      %v1356 = vpack.c.b16 %v1311, %v1302
      %v1357 = vpack.c.b16 %v1312, %v1303
      %v1358 = vpack.c.b16 %v1313, %v1304
      %v1359 = vpack.c.b16 %v1314, %v1305
      %v1360 = vpack.c.b16 %v1315, %v1315
      %v1361 = vpack.c.b16 %v1316, %v1316
      %v1362 = vpack.c.b16 %v1317, %v1317
      %v1363 = vpack.c.b16 %v1318, %v1318
      %v1364 = vpack.c.b16 %v1319, %v1319
      %v1365 = vpack.c.b16 %v1320, %v1320
      %v1366 = vpack.c.b16 %v1321, %v1321
      %v1367 = vpack.c.b16 %v1322, %v1322
      %v1368 = vpack.c.b16 %v1323, %v1323
      %vm1405 = vcmask 588800
      %v1407 = vsel %vm1405, %v1146, 0
      %vm1409 = vcmask 1043456
      %v1411 = vsel %vm1409, %v1360, 0
      %v1414 = vsel %vm1409, %v1361, 0
      %v1417 = vsel %vm1409, %v1362, 0
      %v1420 = vsel %vm1409, %v1363, 0
      %v1423 = vsel %vm1409, %v1364, 0
      %v1426 = vsel %vm1409, %v1365, 0
      %v1429 = vsel %vm1409, %v1366, 0
      %v1432 = vsel %vm1409, %v1367, 0
      %v1435 = vsel %vm1409, %v1368, 0
      %1437 = vmatpush.bf16.msra.mxu0 0
      %1438 = vmatpush.bf16.msra.mxu0 0
      %1439 = vmatpush.bf16.msra.mxu0 0
      %1440 = vmatpush.bf16.msra.mxu0 %v1411
      %1441 = vmatpush.bf16.msra.mxu0 %v1351
      %1442 = vmatpush.bf16.msra.mxu0 %v1342
      %1443 = vmatpush.bf16.msra.mxu0 %v1333
      %1444 = vmatpush.bf16.msra.mxu0 %v1324
      %1445 = vmatmul.bf16.gmra.mxu0 %v1407
      %v1446 = vpop.f32.mrf.mxu0
      %v1447 = vadd.f32 %v1196, %v1446
      %v1448 = vpop.f32.mrf.mxu0
      %1449 = vdwg.mxu0
      %1450 = vmatpush.bf16.msra.mxu0 0
      %1451 = vmatpush.bf16.msra.mxu0 0
      %1452 = vmatpush.bf16.msra.mxu0 0
      %1453 = vmatpush.bf16.msra.mxu0 %v1414
      %1454 = vmatpush.bf16.msra.mxu0 %v1352
      %1455 = vmatpush.bf16.msra.mxu0 %v1343
      %1456 = vmatpush.bf16.msra.mxu0 %v1334
      %1457 = vmatpush.bf16.msra.mxu0 %v1325
      %1458 = vmatmul.bf16.gmra.mxu0 %v1407
      %v1459 = vpop.f32.mrf.mxu0
      %v1460 = vadd.f32 %v1196, %v1459
      %v1461 = vpop.f32.mrf.mxu0
      %1462 = vdwg.mxu0
      %1463 = vmatpush.bf16.msra.mxu0 0
      %1464 = vmatpush.bf16.msra.mxu0 0
      %1465 = vmatpush.bf16.msra.mxu0 0
      %1466 = vmatpush.bf16.msra.mxu0 %v1417
      %1467 = vmatpush.bf16.msra.mxu0 %v1353
      %1468 = vmatpush.bf16.msra.mxu0 %v1344
      %1469 = vmatpush.bf16.msra.mxu0 %v1335
      %1470 = vmatpush.bf16.msra.mxu0 %v1326
      %1471 = vmatmul.bf16.gmra.mxu0 %v1407
      %v1472 = vpop.f32.mrf.mxu0
      %v1473 = vadd.f32 %v1196, %v1472
      %v1474 = vpop.f32.mrf.mxu0
      %1475 = vdwg.mxu0
      %1476 = vmatpush.bf16.msra.mxu0 0
      %1477 = vmatpush.bf16.msra.mxu0 0
      %1478 = vmatpush.bf16.msra.mxu0 0
      %1479 = vmatpush.bf16.msra.mxu0 %v1420
      %1480 = vmatpush.bf16.msra.mxu0 %v1354
      %1481 = vmatpush.bf16.msra.mxu0 %v1345
      %1482 = vmatpush.bf16.msra.mxu0 %v1336
      %1483 = vmatpush.bf16.msra.mxu0 %v1327
      %1484 = vmatmul.bf16.gmra.mxu0 %v1407
      %v1485 = vpop.f32.mrf.mxu0
      %v1486 = vadd.f32 %v1196, %v1485
      %v1487 = vpop.f32.mrf.mxu0
      %1488 = vdwg.mxu0
      %1489 = vmatpush.bf16.msra.mxu0 0
      %1490 = vmatpush.bf16.msra.mxu0 0
      %1491 = vmatpush.bf16.msra.mxu0 0
      %1492 = vmatpush.bf16.msra.mxu0 %v1423
      %1493 = vmatpush.bf16.msra.mxu0 %v1355
      %1494 = vmatpush.bf16.msra.mxu0 %v1346
      %1495 = vmatpush.bf16.msra.mxu0 %v1337
      %1496 = vmatpush.bf16.msra.mxu0 %v1328
      %1497 = vmatmul.bf16.gmra.mxu0 %v1407
      %v1498 = vpop.f32.mrf.mxu0
      %v1499 = vadd.f32 %v1196, %v1498
      %v1500 = vpop.f32.mrf.mxu0
      %1501 = vdwg.mxu0
      %1502 = vmatpush.bf16.msra.mxu0 0
      %1503 = vmatpush.bf16.msra.mxu0 0
      %1504 = vmatpush.bf16.msra.mxu0 0
      %1505 = vmatpush.bf16.msra.mxu0 %v1426
      %1506 = vmatpush.bf16.msra.mxu0 %v1356
      %1507 = vmatpush.bf16.msra.mxu0 %v1347
      %1508 = vmatpush.bf16.msra.mxu0 %v1338
      %1509 = vmatpush.bf16.msra.mxu0 %v1329
      %1510 = vmatmul.bf16.gmra.mxu0 %v1407
      %v1511 = vpop.f32.mrf.mxu0
      %v1512 = vadd.f32 %v1196, %v1511
      %v1513 = vpop.f32.mrf.mxu0
      %1514 = vdwg.mxu0
      %1515 = vmatpush.bf16.msra.mxu0 0
      %1516 = vmatpush.bf16.msra.mxu0 0
      %1517 = vmatpush.bf16.msra.mxu0 0
      %1518 = vmatpush.bf16.msra.mxu0 %v1429
      %1519 = vmatpush.bf16.msra.mxu0 %v1357
      %1520 = vmatpush.bf16.msra.mxu0 %v1348
      %1521 = vmatpush.bf16.msra.mxu0 %v1339
      %1522 = vmatpush.bf16.msra.mxu0 %v1330
      %1523 = vmatmul.bf16.gmra.mxu0 %v1407
      %v1524 = vpop.f32.mrf.mxu0
      %v1525 = vadd.f32 %v1196, %v1524
      %v1526 = vpop.f32.mrf.mxu0
      %1527 = vdwg.mxu0
      %1528 = vmatpush.bf16.msra.mxu0 0
      %1529 = vmatpush.bf16.msra.mxu0 0
      %1530 = vmatpush.bf16.msra.mxu0 0
      %1531 = vmatpush.bf16.msra.mxu0 %v1432
      %1532 = vmatpush.bf16.msra.mxu0 %v1358
      %1533 = vmatpush.bf16.msra.mxu0 %v1349
      %1534 = vmatpush.bf16.msra.mxu0 %v1340
      %1535 = vmatpush.bf16.msra.mxu0 %v1331
      %1536 = vmatmul.bf16.gmra.mxu0 %v1407
      %v1537 = vpop.f32.mrf.mxu0
      %v1538 = vadd.f32 %v1196, %v1537
      %v1539 = vpop.f32.mrf.mxu0
      %1540 = vdwg.mxu0
      %1541 = vmatpush.bf16.msra.mxu0 0
      %1542 = vmatpush.bf16.msra.mxu0 0
      %1543 = vmatpush.bf16.msra.mxu0 0
      %1544 = vmatpush.bf16.msra.mxu0 %v1435
      %1545 = vmatpush.bf16.msra.mxu0 %v1359
      %1546 = vmatpush.bf16.msra.mxu0 %v1350
      %1547 = vmatpush.bf16.msra.mxu0 %v1341
      %1548 = vmatpush.bf16.msra.mxu0 %v1332
      %1549 = vmatmul.bf16.gmra.mxu0 %v1407
      %v1550 = vpop.f32.mrf.mxu0
      %v1551 = vadd.f32 %v1196, %v1550
      %v1552 = vpop.f32.mrf.mxu0
      %1553 = vdwg.mxu0
      %v1554 = vmax.f32 %v1447, 0.0
      %v1555 = vmax.f32 %v1460, 0.0
      %v1556 = vmax.f32 %v1473, 0.0
      %v1557 = vmax.f32 %v1486, 0.0
      %v1558 = vmax.f32 %v1499, 0.0
      %v1559 = vmax.f32 %v1512, 0.0
      %v1560 = vmax.f32 %v1525, 0.0
      %v1561 = vmax.f32 %v1538, 0.0
      %v1562 = vmax.f32 %v1551, 0.0
      %v1563 = vld [vmem:[%s6] sm:$0xff]
      %v1564 = vld [vmem:[%s6 + $0x8] sm:$0x1]
      %v1567 = vperm.slane %v1563, 0
      %v1568 = vperm.slane %v1563, 1
      %v1569 = vperm.slane %v1563, 2
      %v1570 = vperm.slane %v1563, 3
      %v1571 = vperm.slane %v1563, 4
      %v1572 = vperm.slane %v1563, 5
      %v1573 = vperm.slane %v1563, 6
      %v1574 = vperm.slane %v1563, 7
      %v1575 = vperm.slane %v1564, 0
      %v1585 = vmul.f32 %v1554, %v1567
      %v1586 = vmul.f32 %v1555, %v1568
      %v1587 = vmul.f32 %v1556, %v1569
      %v1588 = vmul.f32 %v1557, %v1570
      %v1589 = vmul.f32 %v1558, %v1571
      %v1590 = vmul.f32 %v1559, %v1572
      %v1591 = vmul.f32 %v1560, %v1573
      %v1592 = vmul.f32 %v1561, %v1574
      %v1593 = vmul.f32 %v1562, %v1575
      %vm1594 = vcmask 281600
      %1595 = vst.msk [vmem:[#allocation3] sm:$0xf] %vm1594, 0
      %v1596 = vpack.c.bf16 %v1586, %v1585
      %v1597 = vpack.c.bf16 %v1588, %v1587
      %v1598 = vpack.c.bf16 %v1590, %v1589
      %v1599 = vpack.c.bf16 %v1592, %v1591
      %v1600 = vpack.c.bf16 %v1593, %v1593
      %1606 = vrot.lane.b32.xlu0 %v1596, 35
      %v1607 = vpop.permute.xlu0 %1606
      %1608 = vrot.lane.b32.xlu0 %v1597, 35
      %v1609 = vpop.permute.xlu0 %1608
      %1610 = vrot.lane.b32.xlu0 %v1598, 35
      %v1611 = vpop.permute.xlu0 %1610
      %1612 = vrot.lane.b32.xlu0 %v1599, 35
      %v1613 = vpop.permute.xlu0 %1612
      %1614 = vrot.lane.b32.xlu0 %v1600, 35
      %v1615 = vpop.permute.xlu0 %1614
      %v1616 = vrot.slane %v1607, 4
      %v1617 = vrot.slane %v1609, 4
      %v1618 = vrot.slane %v1611, 4
      %v1619 = vrot.slane %v1613, 4
      %vm1620 = vcmask 285696
      %v1621 = vsel %vm1620, %v1616, %v1607
      %v1622 = vsel %vm385, %v1616, %v1617
      %v1623 = vsel %vm1620, %v1622, %v1609
      %v1624 = vsel %vm385, %v1617, %v1618
      %v1625 = vsel %vm1620, %v1624, %v1611
      %v1626 = vsel %vm385, %v1618, %v1619
      %v1627 = vsel %vm1620, %v1626, %v1613
      %v1628 = vsel %vm1620, %v1619, %v1615
      %vm1634 = vcmask 1043736
      %vm1635 = vcmask 1047556
      %vm1636 = vmor %vm1635, %vm1634
      %1637 = vst.msk [vmem:[#allocation3] sm:$0xff] %vm1636, %v1621
      %1638 = vst [vmem:[#allocation3 + $0x8] sm:$0xff] %v1623
      %1639 = vst [vmem:[#allocation3 + $0x10] sm:$0xff] %v1625
      %1640 = vst [vmem:[#allocation3 + $0x18] sm:$0xff] %v1627
      %vm1641 = vcmask 805888
      %1642 = vst.msk [vmem:[#allocation3 + $0x20] sm:$0xf] %vm1641, %v1628
      %vm1643 = vcmask 1044248
      %vm1644 = vcmask 310276
      %vm1645 = vmor %vm1644, %vm1643
      %1646 = vst.msk [vmem:[#allocation3 + $0x20] sm:$0xff] %vm1645, 0
      %v1647 = vld [vmem:[#allocation3] sm:$0xff]
      %v1648 = vld [vmem:[#allocation3 + $0x8] sm:$0xff]
      %v1649 = vld [vmem:[#allocation3 + $0x10] sm:$0xff]
      %v1650 = vld [vmem:[#allocation3 + $0x18] sm:$0xff]
      %v1651 = vld [vmem:[#allocation3 + $0x20] sm:$0xff]
      %1652 = vst [vmem:[#allocation4] sm:$0xff] %v1647
      %1653 = vst [vmem:[#allocation4 + $0x8] sm:$0xff] %v1648
      %1654 = vst [vmem:[#allocation4 + $0x10] sm:$0xff] %v1649
      %1655 = vst [vmem:[#allocation4 + $0x18] sm:$0xff] %v1650
      %vm1656 = vcmask 519168
      %1657 = vst.msk [vmem:[#allocation4 + $0x20] sm:$0xf] %vm1656, %v1651
      %1663 = vrot.lane.b32.xlu0 %v1647, 127
      %v1664 = vpop.permute.xlu0 %1663
      %1665 = vrot.lane.b32.xlu0 %v1648, 127
      %v1666 = vpop.permute.xlu0 %1665
      %1667 = vrot.lane.b32.xlu0 %v1649, 127
      %v1668 = vpop.permute.xlu0 %1667
      %1669 = vrot.lane.b32.xlu0 %v1650, 127
      %v1670 = vpop.permute.xlu0 %1669
      %1671 = vrot.lane.b32.xlu0 %v1651, 127
      %v1672 = vpop.permute.xlu0 %1671
      %v1673 = vrot.slane %v1664, 4
      %v1674 = vrot.slane %v1666, 4
      %v1675 = vrot.slane %v1668, 4
      %v1676 = vrot.slane %v1670, 4
      %v1677 = vrot.slane %v1672, 4
      %v1678 = vsel %vm385, %v1673, %v1674
      %v1679 = vsel %vm387, %v1664, %v1678
      %v1680 = vsel %vm385, %v1674, %v1675
      %v1681 = vsel %vm387, %v1666, %v1680
      %v1682 = vsel %vm385, %v1675, %v1676
      %v1683 = vsel %vm387, %v1668, %v1682
      %v1684 = vsel %vm385, %v1676, %v1677
      %v1685 = vsel %vm387, %v1670, %v1684
      %1691 = vst [vmem:[#allocation4 + $0x24] sm:$0xff] %v1679
      %1692 = vst [vmem:[#allocation4 + $0x2c] sm:$0xff] %v1681
      %1693 = vst [vmem:[#allocation4 + $0x34] sm:$0xff] %v1683
      %1694 = vst [vmem:[#allocation4 + $0x3c] sm:$0xff] %v1685
      %1695 = vst.msk [vmem:[#allocation4 + $0x44] sm:$0xf] %vm1656, %v1672
      %1696 = vrot.lane.b32.xlu0 %v1647, 126
      %v1697 = vpop.permute.xlu0 %1696
      %1698 = vrot.lane.b32.xlu0 %v1648, 126
      %v1699 = vpop.permute.xlu0 %1698
      %1700 = vrot.lane.b32.xlu0 %v1649, 126
      %v1701 = vpop.permute.xlu0 %1700
      %1702 = vrot.lane.b32.xlu0 %v1650, 126
      %v1703 = vpop.permute.xlu0 %1702
      %1704 = vrot.lane.b32.xlu0 %v1651, 126
      %v1705 = vpop.permute.xlu0 %1704
      %v1706 = vrot.slane %v1697, 4
      %v1707 = vrot.slane %v1699, 4
      %v1708 = vrot.slane %v1701, 4
      %v1709 = vrot.slane %v1703, 4
      %v1710 = vrot.slane %v1705, 4
      %v1711 = vsel %vm385, %v1706, %v1707
      %v1712 = vsel %vm485, %v1697, %v1711
      %v1713 = vsel %vm385, %v1707, %v1708
      %v1714 = vsel %vm485, %v1699, %v1713
      %v1715 = vsel %vm385, %v1708, %v1709
      %v1716 = vsel %vm485, %v1701, %v1715
      %v1717 = vsel %vm385, %v1709, %v1710
      %v1718 = vsel %vm485, %v1703, %v1717
      %1724 = vst [vmem:[#allocation4 + $0x48] sm:$0xff] %v1712
      %1725 = vst [vmem:[#allocation4 + $0x50] sm:$0xff] %v1714
      %1726 = vst [vmem:[#allocation4 + $0x58] sm:$0xff] %v1716
      %1727 = vst [vmem:[#allocation4 + $0x60] sm:$0xff] %v1718
      %1728 = vst.msk [vmem:[#allocation4 + $0x68] sm:$0xf] %vm1656, %v1705
      %1729 = vrot.lane.b32.xlu0 %v1647, 94
      %v1730 = vpop.permute.xlu0 %1729
      %1731 = vrot.lane.b32.xlu0 %v1648, 94
      %v1732 = vpop.permute.xlu0 %1731
      %1733 = vrot.lane.b32.xlu0 %v1649, 94
      %v1734 = vpop.permute.xlu0 %1733
      %1735 = vrot.lane.b32.xlu0 %v1650, 94
      %v1736 = vpop.permute.xlu0 %1735
      %1737 = vrot.lane.b32.xlu0 %v1651, 94
      %v1738 = vpop.permute.xlu0 %1737
      %v1739 = vrot.slane %v1730, 4
      %v1740 = vrot.slane %v1732, 4
      %v1741 = vrot.slane %v1734, 4
      %v1742 = vrot.slane %v1736, 4
      %v1743 = vrot.slane %v1738, 4
      %v1744 = vsel %vm385, %v1739, %v1740
      %v1745 = vsel %vm583, %v1730, %v1744
      %v1746 = vsel %vm385, %v1740, %v1741
      %v1747 = vsel %vm583, %v1732, %v1746
      %v1748 = vsel %vm385, %v1741, %v1742
      %v1749 = vsel %vm583, %v1734, %v1748
      %v1750 = vsel %vm385, %v1742, %v1743
      %v1751 = vsel %vm583, %v1736, %v1750
      %1757 = vst [vmem:[#allocation4 + $0x6c] sm:$0xff] %v1745
      %1758 = vst [vmem:[#allocation4 + $0x74] sm:$0xff] %v1747
      %1759 = vst [vmem:[#allocation4 + $0x7c] sm:$0xff] %v1749
      %1760 = vst [vmem:[#allocation4 + $0x84] sm:$0xff] %v1751
      %1761 = vst.msk [vmem:[#allocation4 + $0x8c] sm:$0xf] %vm1656, %v1738
      %1762 = vrot.lane.b32.xlu0 %v1647, 93
      %v1763 = vpop.permute.xlu0 %1762
      %1764 = vrot.lane.b32.xlu0 %v1648, 93
      %v1765 = vpop.permute.xlu0 %1764
      %1766 = vrot.lane.b32.xlu0 %v1649, 93
      %v1767 = vpop.permute.xlu0 %1766
      %1768 = vrot.lane.b32.xlu0 %v1650, 93
      %v1769 = vpop.permute.xlu0 %1768
      %1770 = vrot.lane.b32.xlu0 %v1651, 93
      %v1771 = vpop.permute.xlu0 %1770
      %v1772 = vrot.slane %v1763, 4
      %v1773 = vrot.slane %v1765, 4
      %v1774 = vrot.slane %v1767, 4
      %v1775 = vrot.slane %v1769, 4
      %v1776 = vrot.slane %v1771, 4
      %v1777 = vsel %vm385, %v1772, %v1773
      %v1778 = vsel %vm681, %v1763, %v1777
      %v1779 = vsel %vm385, %v1773, %v1774
      %v1780 = vsel %vm681, %v1765, %v1779
      %v1781 = vsel %vm385, %v1774, %v1775
      %v1782 = vsel %vm681, %v1767, %v1781
      %v1783 = vsel %vm385, %v1775, %v1776
      %v1784 = vsel %vm681, %v1769, %v1783
      %1790 = vst [vmem:[#allocation4 + $0x90] sm:$0xff] %v1778
      %1791 = vst [vmem:[#allocation4 + $0x98] sm:$0xff] %v1780
      %1792 = vst [vmem:[#allocation4 + $0xa0] sm:$0xff] %v1782
      %1793 = vst [vmem:[#allocation4 + $0xa8] sm:$0xff] %v1784
      %1794 = vst.msk [vmem:[#allocation4 + $0xb0] sm:$0xf] %vm1656, %v1771
      %1795 = vrot.lane.b32.xlu0 %v1647, 92
      %v1796 = vpop.permute.xlu0 %1795
      %1797 = vrot.lane.b32.xlu0 %v1648, 92
      %v1798 = vpop.permute.xlu0 %1797
      %1799 = vrot.lane.b32.xlu0 %v1649, 92
      %v1800 = vpop.permute.xlu0 %1799
      %1801 = vrot.lane.b32.xlu0 %v1650, 92
      %v1802 = vpop.permute.xlu0 %1801
      %1803 = vrot.lane.b32.xlu0 %v1651, 92
      %v1804 = vpop.permute.xlu0 %1803
      %v1805 = vrot.slane %v1796, 4
      %v1806 = vrot.slane %v1798, 4
      %v1807 = vrot.slane %v1800, 4
      %v1808 = vrot.slane %v1802, 4
      %v1809 = vrot.slane %v1804, 4
      %v1810 = vsel %vm385, %v1805, %v1806
      %v1811 = vsel %vm779, %v1796, %v1810
      %v1812 = vsel %vm385, %v1806, %v1807
      %v1813 = vsel %vm779, %v1798, %v1812
      %v1814 = vsel %vm385, %v1807, %v1808
      %v1815 = vsel %vm779, %v1800, %v1814
      %v1816 = vsel %vm385, %v1808, %v1809
      %v1817 = vsel %vm779, %v1802, %v1816
      %1823 = vst [vmem:[#allocation4 + $0xb4] sm:$0xff] %v1811
      %1824 = vst [vmem:[#allocation4 + $0xbc] sm:$0xff] %v1813
      %1825 = vst [vmem:[#allocation4 + $0xc4] sm:$0xff] %v1815
      %1826 = vst [vmem:[#allocation4 + $0xcc] sm:$0xff] %v1817
      %1827 = vst.msk [vmem:[#allocation4 + $0xd4] sm:$0xf] %vm1656, %v1804
      %1828 = vrot.lane.b32.xlu0 %v1647, 60
      %v1829 = vpop.permute.xlu0 %1828
      %1830 = vrot.lane.b32.xlu0 %v1648, 60
      %v1831 = vpop.permute.xlu0 %1830
      %1832 = vrot.lane.b32.xlu0 %v1649, 60
      %v1833 = vpop.permute.xlu0 %1832
      %1834 = vrot.lane.b32.xlu0 %v1650, 60
      %v1835 = vpop.permute.xlu0 %1834
      %1836 = vrot.lane.b32.xlu0 %v1651, 60
      %v1837 = vpop.permute.xlu0 %1836
      %v1838 = vrot.slane %v1829, 4
      %v1839 = vrot.slane %v1831, 4
      %v1840 = vrot.slane %v1833, 4
      %v1841 = vrot.slane %v1835, 4
      %v1842 = vrot.slane %v1837, 4
      %v1843 = vsel %vm385, %v1838, %v1839
      %v1844 = vsel %vm877, %v1829, %v1843
      %v1845 = vsel %vm385, %v1839, %v1840
      %v1846 = vsel %vm877, %v1831, %v1845
      %v1847 = vsel %vm385, %v1840, %v1841
      %v1848 = vsel %vm877, %v1833, %v1847
      %v1849 = vsel %vm385, %v1841, %v1842
      %v1850 = vsel %vm877, %v1835, %v1849
      %v1851 = vsel %vm877, %v1837, %v1842
      %1857 = vst [vmem:[#allocation4 + $0xd8] sm:$0xff] %v1844
      %1858 = vst [vmem:[#allocation4 + $0xe0] sm:$0xff] %v1846
      %1859 = vst [vmem:[#allocation4 + $0xe8] sm:$0xff] %v1848
      %1860 = vst [vmem:[#allocation4 + $0xf0] sm:$0xff] %v1850
      %1861 = vst.msk [vmem:[#allocation4 + $0xf8] sm:$0xf] %vm1656, %v1851
      %1862 = vrot.lane.b32.xlu0 %v1647, 59
      %v1863 = vpop.permute.xlu0 %1862
      %1864 = vrot.lane.b32.xlu0 %v1648, 59
      %v1865 = vpop.permute.xlu0 %1864
      %1866 = vrot.lane.b32.xlu0 %v1649, 59
      %v1867 = vpop.permute.xlu0 %1866
      %1868 = vrot.lane.b32.xlu0 %v1650, 59
      %v1869 = vpop.permute.xlu0 %1868
      %1870 = vrot.lane.b32.xlu0 %v1651, 59
      %v1871 = vpop.permute.xlu0 %1870
      %v1872 = vrot.slane %v1863, 4
      %v1873 = vrot.slane %v1865, 4
      %v1874 = vrot.slane %v1867, 4
      %v1875 = vrot.slane %v1869, 4
      %v1876 = vrot.slane %v1871, 4
      %v1877 = vsel %vm385, %v1872, %v1873
      %v1878 = vsel %vm977, %v1863, %v1877
      %v1879 = vsel %vm385, %v1873, %v1874
      %v1880 = vsel %vm977, %v1865, %v1879
      %v1881 = vsel %vm385, %v1874, %v1875
      %v1882 = vsel %vm977, %v1867, %v1881
      %v1883 = vsel %vm385, %v1875, %v1876
      %v1884 = vsel %vm977, %v1869, %v1883
      %v1885 = vsel %vm977, %v1871, %v1876
      %1891 = vst [vmem:[#allocation4 + $0xfc] sm:$0xff] %v1878
      %1892 = vst [vmem:[#allocation4 + $0x104] sm:$0xff] %v1880
      %1893 = vst [vmem:[#allocation4 + $0x10c] sm:$0xff] %v1882
      %1894 = vst [vmem:[#allocation4 + $0x114] sm:$0xff] %v1884
      %1895 = vst.msk [vmem:[#allocation4 + $0x11c] sm:$0xf] %vm1656, %v1885
      %1896 = vrot.lane.b32.xlu0 %v1647, 58
      %v1897 = vpop.permute.xlu0 %1896
      %1898 = vrot.lane.b32.xlu0 %v1648, 58
      %v1899 = vpop.permute.xlu0 %1898
      %1900 = vrot.lane.b32.xlu0 %v1649, 58
      %v1901 = vpop.permute.xlu0 %1900
      %1902 = vrot.lane.b32.xlu0 %v1650, 58
      %v1903 = vpop.permute.xlu0 %1902
      %1904 = vrot.lane.b32.xlu0 %v1651, 58
      %v1905 = vpop.permute.xlu0 %1904
      %v1906 = vrot.slane %v1897, 4
      %v1907 = vrot.slane %v1899, 4
      %v1908 = vrot.slane %v1901, 4
      %v1909 = vrot.slane %v1903, 4
      %v1910 = vrot.slane %v1905, 4
      %v1911 = vsel %vm385, %v1906, %v1907
      %v1912 = vsel %vm1077, %v1897, %v1911
      %v1913 = vsel %vm385, %v1907, %v1908
      %v1914 = vsel %vm1077, %v1899, %v1913
      %v1915 = vsel %vm385, %v1908, %v1909
      %v1916 = vsel %vm1077, %v1901, %v1915
      %v1917 = vsel %vm385, %v1909, %v1910
      %v1918 = vsel %vm1077, %v1903, %v1917
      %v1919 = vsel %vm1077, %v1905, %v1910
      %1925 = vst [vmem:[#allocation4 + $0x120] sm:$0xff] %v1912
      %1926 = vst [vmem:[#allocation4 + $0x128] sm:$0xff] %v1914
      %1927 = vst [vmem:[#allocation4 + $0x130] sm:$0xff] %v1916
      %1928 = vst [vmem:[#allocation4 + $0x138] sm:$0xff] %v1918
      %1929 = vst.msk [vmem:[#allocation4 + $0x140] sm:$0xf] %vm1656, %v1919
      %v1930 = vld [vmem:[%s4] sm:$0xf]
      %v1931 = vld [vmem:[#allocation4] sm:$0xff]
      %v1932 = vld [vmem:[#allocation4 + $0x8] sm:$0xff]
      %v1933 = vld [vmem:[#allocation4 + $0x10] sm:$0xff]
      %v1934 = vld [vmem:[#allocation4 + $0x18] sm:$0xff]
      %v1935 = vld [vmem:[#allocation4 + $0x20] sm:$0xf]
      %v1936 = vld [vmem:[#allocation4 + $0x24] sm:$0xff]
      %v1937 = vld [vmem:[#allocation4 + $0x2c] sm:$0xff]
      %v1938 = vld [vmem:[#allocation4 + $0x34] sm:$0xff]
      %v1939 = vld [vmem:[#allocation4 + $0x3c] sm:$0xff]
      %v1940 = vld [vmem:[#allocation4 + $0x44] sm:$0xf]
      %v1941 = vld [vmem:[#allocation4 + $0x48] sm:$0xff]
      %v1942 = vld [vmem:[#allocation4 + $0x50] sm:$0xff]
      %v1943 = vld [vmem:[#allocation4 + $0x58] sm:$0xff]
      %v1944 = vld [vmem:[#allocation4 + $0x60] sm:$0xff]
      %v1945 = vld [vmem:[#allocation4 + $0x68] sm:$0xf]
      %v1946 = vld [vmem:[#allocation4 + $0x6c] sm:$0xff]
      %v1947 = vld [vmem:[#allocation4 + $0x74] sm:$0xff]
      %v1948 = vld [vmem:[#allocation4 + $0x7c] sm:$0xff]
      %v1949 = vld [vmem:[#allocation4 + $0x84] sm:$0xff]
      %v1950 = vld [vmem:[#allocation4 + $0x8c] sm:$0xf]
      %v1951 = vld [vmem:[#allocation4 + $0x90] sm:$0xff]
      %v1952 = vld [vmem:[#allocation4 + $0x98] sm:$0xff]
      %v1953 = vld [vmem:[#allocation4 + $0xa0] sm:$0xff]
      %v1954 = vld [vmem:[#allocation4 + $0xa8] sm:$0xff]
      %v1955 = vld [vmem:[#allocation4 + $0xb0] sm:$0xf]
      %v1956 = vld [vmem:[#allocation4 + $0xb4] sm:$0xff]
      %v1957 = vld [vmem:[#allocation4 + $0xbc] sm:$0xff]
      %v1958 = vld [vmem:[#allocation4 + $0xc4] sm:$0xff]
      %v1959 = vld [vmem:[#allocation4 + $0xcc] sm:$0xff]
      %v1960 = vld [vmem:[#allocation4 + $0xd4] sm:$0xf]
      %v1961 = vld [vmem:[#allocation4 + $0xd8] sm:$0xff]
      %v1962 = vld [vmem:[#allocation4 + $0xe0] sm:$0xff]
      %v1963 = vld [vmem:[#allocation4 + $0xe8] sm:$0xff]
      %v1964 = vld [vmem:[#allocation4 + $0xf0] sm:$0xff]
      %v1965 = vld [vmem:[#allocation4 + $0xf8] sm:$0xf]
      %v1966 = vld [vmem:[#allocation4 + $0xfc] sm:$0xff]
      %v1967 = vld [vmem:[#allocation4 + $0x104] sm:$0xff]
      %v1968 = vld [vmem:[#allocation4 + $0x10c] sm:$0xff]
      %v1969 = vld [vmem:[#allocation4 + $0x114] sm:$0xff]
      %v1970 = vld [vmem:[#allocation4 + $0x11c] sm:$0xf]
      %v1971 = vld [vmem:[#allocation4 + $0x120] sm:$0xff]
      %v1972 = vld [vmem:[#allocation4 + $0x128] sm:$0xff]
      %v1973 = vld [vmem:[#allocation4 + $0x130] sm:$0xff]
      %v1974 = vld [vmem:[#allocation4 + $0x138] sm:$0xff]
      %v1975 = vld [vmem:[#allocation4 + $0x140] sm:$0xf]
      %v1976 = vld [vmem:[%s5] sm:$0xff]
      %1978 = vset.pattern.permute.xlu0 0
      %1979 = vperm.xlu0 %1978, %v1976
      %v1980 = vpop.permute.xlu0 %1979
      %v2027 = vunpack.c.l.b16 %v1931
      %v2028 = vunpack.c.h.b16 %v1931
      %v2029 = vunpack.c.l.b16 %v1932
      %v2030 = vunpack.c.h.b16 %v1932
      %v2031 = vunpack.c.l.b16 %v1933
      %v2032 = vunpack.c.h.b16 %v1933
      %v2033 = vunpack.c.l.b16 %v1934
      %v2034 = vunpack.c.h.b16 %v1934
      %v2035 = vunpack.c.l.b16 %v1935
      %v2036 = vunpack.c.l.b16 %v1936
      %v2037 = vunpack.c.h.b16 %v1936
      %v2038 = vunpack.c.l.b16 %v1937
      %v2039 = vunpack.c.h.b16 %v1937
      %v2040 = vunpack.c.l.b16 %v1938
      %v2041 = vunpack.c.h.b16 %v1938
      %v2042 = vunpack.c.l.b16 %v1939
      %v2043 = vunpack.c.h.b16 %v1939
      %v2044 = vunpack.c.l.b16 %v1940
      %v2045 = vunpack.c.l.b16 %v1941
      %v2046 = vunpack.c.h.b16 %v1941
      %v2047 = vunpack.c.l.b16 %v1942
      %v2048 = vunpack.c.h.b16 %v1942
      %v2049 = vunpack.c.l.b16 %v1943
      %v2050 = vunpack.c.h.b16 %v1943
      %v2051 = vunpack.c.l.b16 %v1944
      %v2052 = vunpack.c.h.b16 %v1944
      %v2053 = vunpack.c.l.b16 %v1945
      %v2054 = vunpack.c.l.b16 %v1946
      %v2055 = vunpack.c.h.b16 %v1946
      %v2056 = vunpack.c.l.b16 %v1947
      %v2057 = vunpack.c.h.b16 %v1947
      %v2058 = vunpack.c.l.b16 %v1948
      %v2059 = vunpack.c.h.b16 %v1948
      %v2060 = vunpack.c.l.b16 %v1949
      %v2061 = vunpack.c.h.b16 %v1949
      %v2062 = vunpack.c.l.b16 %v1950
      %v2063 = vunpack.c.l.b16 %v1951
      %v2064 = vunpack.c.h.b16 %v1951
      %v2065 = vunpack.c.l.b16 %v1952
      %v2066 = vunpack.c.h.b16 %v1952
      %v2067 = vunpack.c.l.b16 %v1953
      %v2068 = vunpack.c.h.b16 %v1953
      %v2069 = vunpack.c.l.b16 %v1954
      %v2070 = vunpack.c.h.b16 %v1954
      %v2071 = vunpack.c.l.b16 %v1955
      %v2072 = vunpack.c.l.b16 %v1956
      %v2073 = vunpack.c.h.b16 %v1956
      %v2074 = vunpack.c.l.b16 %v1957
      %v2075 = vunpack.c.h.b16 %v1957
      %v2076 = vunpack.c.l.b16 %v1958
      %v2077 = vunpack.c.h.b16 %v1958
      %v2078 = vunpack.c.l.b16 %v1959
      %v2079 = vunpack.c.h.b16 %v1959
      %v2080 = vunpack.c.l.b16 %v1960
      %v2081 = vunpack.c.l.b16 %v1961
      %v2082 = vunpack.c.h.b16 %v1961
      %v2083 = vunpack.c.l.b16 %v1962
      %v2084 = vunpack.c.h.b16 %v1962
      %v2085 = vunpack.c.l.b16 %v1963
      %v2086 = vunpack.c.h.b16 %v1963
      %v2087 = vunpack.c.l.b16 %v1964
      %v2088 = vunpack.c.h.b16 %v1964
      %v2089 = vunpack.c.l.b16 %v1965
      %v2090 = vunpack.c.l.b16 %v1966
      %v2091 = vunpack.c.h.b16 %v1966
      %v2092 = vunpack.c.l.b16 %v1967
      %v2093 = vunpack.c.h.b16 %v1967
      %v2094 = vunpack.c.l.b16 %v1968
      %v2095 = vunpack.c.h.b16 %v1968
      %v2096 = vunpack.c.l.b16 %v1969
      %v2097 = vunpack.c.h.b16 %v1969
      %v2098 = vunpack.c.l.b16 %v1970
      %v2099 = vunpack.c.l.b16 %v1971
      %v2100 = vunpack.c.h.b16 %v1971
      %v2101 = vunpack.c.l.b16 %v1972
      %v2102 = vunpack.c.h.b16 %v1972
      %v2103 = vunpack.c.l.b16 %v1973
      %v2104 = vunpack.c.h.b16 %v1973
      %v2105 = vunpack.c.l.b16 %v1974
      %v2106 = vunpack.c.h.b16 %v1974
      %v2107 = vunpack.c.l.b16 %v1975
      %v2108 = vpack.c.b16 %v2036, %v2027
      %v2109 = vpack.c.b16 %v2037, %v2028
      %v2110 = vpack.c.b16 %v2038, %v2029
      %v2111 = vpack.c.b16 %v2039, %v2030
      %v2112 = vpack.c.b16 %v2040, %v2031
      %v2113 = vpack.c.b16 %v2041, %v2032
      %v2114 = vpack.c.b16 %v2042, %v2033
      %v2115 = vpack.c.b16 %v2043, %v2034
      %v2116 = vpack.c.b16 %v2044, %v2035
      %v2117 = vpack.c.b16 %v2054, %v2045
      %v2118 = vpack.c.b16 %v2055, %v2046
      %v2119 = vpack.c.b16 %v2056, %v2047
      %v2120 = vpack.c.b16 %v2057, %v2048
      %v2121 = vpack.c.b16 %v2058, %v2049
      %v2122 = vpack.c.b16 %v2059, %v2050
      %v2123 = vpack.c.b16 %v2060, %v2051
      %v2124 = vpack.c.b16 %v2061, %v2052
      %v2125 = vpack.c.b16 %v2062, %v2053
      %v2126 = vpack.c.b16 %v2072, %v2063
      %v2127 = vpack.c.b16 %v2073, %v2064
      %v2128 = vpack.c.b16 %v2074, %v2065
      %v2129 = vpack.c.b16 %v2075, %v2066
      %v2130 = vpack.c.b16 %v2076, %v2067
      %v2131 = vpack.c.b16 %v2077, %v2068
      %v2132 = vpack.c.b16 %v2078, %v2069
      %v2133 = vpack.c.b16 %v2079, %v2070
      %v2134 = vpack.c.b16 %v2080, %v2071
      %v2135 = vpack.c.b16 %v2090, %v2081
      %v2136 = vpack.c.b16 %v2091, %v2082
      %v2137 = vpack.c.b16 %v2092, %v2083
      %v2138 = vpack.c.b16 %v2093, %v2084
      %v2139 = vpack.c.b16 %v2094, %v2085
      %v2140 = vpack.c.b16 %v2095, %v2086
      %v2141 = vpack.c.b16 %v2096, %v2087
      %v2142 = vpack.c.b16 %v2097, %v2088
      %v2143 = vpack.c.b16 %v2098, %v2089
      %v2144 = vpack.c.b16 %v2099, %v2099
      %v2145 = vpack.c.b16 %v2100, %v2100
      %v2146 = vpack.c.b16 %v2101, %v2101
      %v2147 = vpack.c.b16 %v2102, %v2102
      %v2148 = vpack.c.b16 %v2103, %v2103
      %v2149 = vpack.c.b16 %v2104, %v2104
      %v2150 = vpack.c.b16 %v2105, %v2105
      %v2151 = vpack.c.b16 %v2106, %v2106
      %v2152 = vpack.c.b16 %v2107, %v2107
      %v2190 = vsel %vm1405, %v1930, 0
      %v2193 = vsel %vm1409, %v2144, 0
      %v2196 = vsel %vm1409, %v2145, 0
      %v2199 = vsel %vm1409, %v2146, 0
      %v2202 = vsel %vm1409, %v2147, 0
      %v2205 = vsel %vm1409, %v2148, 0
      %v2208 = vsel %vm1409, %v2149, 0
      %v2211 = vsel %vm1409, %v2150, 0
      %v2214 = vsel %vm1409, %v2151, 0
      %v2217 = vsel %vm1409, %v2152, 0
      %2219 = vmatpush.bf16.msra.mxu0 0
      %2220 = vmatpush.bf16.msra.mxu0 0
      %2221 = vmatpush.bf16.msra.mxu0 0
      %2222 = vmatpush.bf16.msra.mxu0 %v2193
      %2223 = vmatpush.bf16.msra.mxu0 %v2135
      %2224 = vmatpush.bf16.msra.mxu0 %v2126
      %2225 = vmatpush.bf16.msra.mxu0 %v2117
      %2226 = vmatpush.bf16.msra.mxu0 %v2108
      %2227 = vmatmul.bf16.gmra.mxu0 %v2190
      %v2228 = vpop.f32.mrf.mxu0
      %v2229 = vadd.f32 %v1980, %v2228
      %v2230 = vpop.f32.mrf.mxu0
      %2231 = vdwg.mxu0
      %2232 = vmatpush.bf16.msra.mxu0 0
      %2233 = vmatpush.bf16.msra.mxu0 0
      %2234 = vmatpush.bf16.msra.mxu0 0
      %2235 = vmatpush.bf16.msra.mxu0 %v2196
      %2236 = vmatpush.bf16.msra.mxu0 %v2136
      %2237 = vmatpush.bf16.msra.mxu0 %v2127
      %2238 = vmatpush.bf16.msra.mxu0 %v2118
      %2239 = vmatpush.bf16.msra.mxu0 %v2109
      %2240 = vmatmul.bf16.gmra.mxu0 %v2190
      %v2241 = vpop.f32.mrf.mxu0
      %v2242 = vadd.f32 %v1980, %v2241
      %v2243 = vpop.f32.mrf.mxu0
      %2244 = vdwg.mxu0
      %2245 = vmatpush.bf16.msra.mxu0 0
      %2246 = vmatpush.bf16.msra.mxu0 0
      %2247 = vmatpush.bf16.msra.mxu0 0
      %2248 = vmatpush.bf16.msra.mxu0 %v2199
      %2249 = vmatpush.bf16.msra.mxu0 %v2137
      %2250 = vmatpush.bf16.msra.mxu0 %v2128
      %2251 = vmatpush.bf16.msra.mxu0 %v2119
      %2252 = vmatpush.bf16.msra.mxu0 %v2110
      %2253 = vmatmul.bf16.gmra.mxu0 %v2190
      %v2254 = vpop.f32.mrf.mxu0
      %v2255 = vadd.f32 %v1980, %v2254
      %v2256 = vpop.f32.mrf.mxu0
      %2257 = vdwg.mxu0
      %2258 = vmatpush.bf16.msra.mxu0 0
      %2259 = vmatpush.bf16.msra.mxu0 0
      %2260 = vmatpush.bf16.msra.mxu0 0
      %2261 = vmatpush.bf16.msra.mxu0 %v2202
      %2262 = vmatpush.bf16.msra.mxu0 %v2138
      %2263 = vmatpush.bf16.msra.mxu0 %v2129
      %2264 = vmatpush.bf16.msra.mxu0 %v2120
      %2265 = vmatpush.bf16.msra.mxu0 %v2111
      %2266 = vmatmul.bf16.gmra.mxu0 %v2190
      %v2267 = vpop.f32.mrf.mxu0
      %v2268 = vadd.f32 %v1980, %v2267
      %v2269 = vpop.f32.mrf.mxu0
      %2270 = vdwg.mxu0
      %2271 = vmatpush.bf16.msra.mxu0 0
      %2272 = vmatpush.bf16.msra.mxu0 0
      %2273 = vmatpush.bf16.msra.mxu0 0
      %2274 = vmatpush.bf16.msra.mxu0 %v2205
      %2275 = vmatpush.bf16.msra.mxu0 %v2139
      %2276 = vmatpush.bf16.msra.mxu0 %v2130
      %2277 = vmatpush.bf16.msra.mxu0 %v2121
      %2278 = vmatpush.bf16.msra.mxu0 %v2112
      %2279 = vmatmul.bf16.gmra.mxu0 %v2190
      %v2280 = vpop.f32.mrf.mxu0
      %v2281 = vadd.f32 %v1980, %v2280
      %v2282 = vpop.f32.mrf.mxu0
      %2283 = vdwg.mxu0
      %2284 = vmatpush.bf16.msra.mxu0 0
      %2285 = vmatpush.bf16.msra.mxu0 0
      %2286 = vmatpush.bf16.msra.mxu0 0
      %2287 = vmatpush.bf16.msra.mxu0 %v2208
      %2288 = vmatpush.bf16.msra.mxu0 %v2140
      %2289 = vmatpush.bf16.msra.mxu0 %v2131
      %2290 = vmatpush.bf16.msra.mxu0 %v2122
      %2291 = vmatpush.bf16.msra.mxu0 %v2113
      %2292 = vmatmul.bf16.gmra.mxu0 %v2190
      %v2293 = vpop.f32.mrf.mxu0
      %v2294 = vadd.f32 %v1980, %v2293
      %v2295 = vpop.f32.mrf.mxu0
      %2296 = vdwg.mxu0
      %2297 = vmatpush.bf16.msra.mxu0 0
      %2298 = vmatpush.bf16.msra.mxu0 0
      %2299 = vmatpush.bf16.msra.mxu0 0
      %2300 = vmatpush.bf16.msra.mxu0 %v2211
      %2301 = vmatpush.bf16.msra.mxu0 %v2141
      %2302 = vmatpush.bf16.msra.mxu0 %v2132
      %2303 = vmatpush.bf16.msra.mxu0 %v2123
      %2304 = vmatpush.bf16.msra.mxu0 %v2114
      %2305 = vmatmul.bf16.gmra.mxu0 %v2190
      %v2306 = vpop.f32.mrf.mxu0
      %v2307 = vadd.f32 %v1980, %v2306
      %v2308 = vpop.f32.mrf.mxu0
      %2309 = vdwg.mxu0
      %2310 = vmatpush.bf16.msra.mxu0 0
      %2311 = vmatpush.bf16.msra.mxu0 0
      %2312 = vmatpush.bf16.msra.mxu0 0
      %2313 = vmatpush.bf16.msra.mxu0 %v2214
      %2314 = vmatpush.bf16.msra.mxu0 %v2142
      %2315 = vmatpush.bf16.msra.mxu0 %v2133
      %2316 = vmatpush.bf16.msra.mxu0 %v2124
      %2317 = vmatpush.bf16.msra.mxu0 %v2115
      %2318 = vmatmul.bf16.gmra.mxu0 %v2190
      %v2319 = vpop.f32.mrf.mxu0
      %v2320 = vadd.f32 %v1980, %v2319
      %v2321 = vpop.f32.mrf.mxu0
      %2322 = vdwg.mxu0
      %2323 = vmatpush.bf16.msra.mxu0 0
      %2324 = vmatpush.bf16.msra.mxu0 0
      %2325 = vmatpush.bf16.msra.mxu0 0
      %2326 = vmatpush.bf16.msra.mxu0 %v2217
      %2327 = vmatpush.bf16.msra.mxu0 %v2143
      %2328 = vmatpush.bf16.msra.mxu0 %v2134
      %2329 = vmatpush.bf16.msra.mxu0 %v2125
      %2330 = vmatpush.bf16.msra.mxu0 %v2116
      %2331 = vmatmul.bf16.gmra.mxu0 %v2190
      %v2332 = vpop.f32.mrf.mxu0
      %v2333 = vadd.f32 %v1980, %v2332
      %v2334 = vpop.f32.mrf.mxu0
      %2335 = vdwg.mxu0
      %v2336 = vmax.f32 %v2229, 0.0
      %v2337 = vmax.f32 %v2242, 0.0
      %v2338 = vmax.f32 %v2255, 0.0
      %v2339 = vmax.f32 %v2268, 0.0
      %v2340 = vmax.f32 %v2281, 0.0
      %v2341 = vmax.f32 %v2294, 0.0
      %v2342 = vmax.f32 %v2307, 0.0
      %v2343 = vmax.f32 %v2320, 0.0
      %v2344 = vmax.f32 %v2333, 0.0
      %2345 = vst [vmem:[%s298] sm:$0xff] %v2336
      %2346 = vst [vmem:[%s298 + $0x8] sm:$0xff] %v2337
      %2347 = vst [vmem:[%s298 + $0x10] sm:$0xff] %v2338
      %2348 = vst [vmem:[%s298 + $0x18] sm:$0xff] %v2339
      %2349 = vst [vmem:[%s298 + $0x20] sm:$0xff] %v2340
      %2350 = vst [vmem:[%s298 + $0x28] sm:$0xff] %v2341
      %2351 = vst [vmem:[%s298 + $0x30] sm:$0xff] %v2342
      %2352 = vst [vmem:[%s298 + $0x38] sm:$0xff] %v2343
      %vm2353 = vcmask 523264
      %2354 = vst.msk [vmem:[%s298 + $0x40] sm:$0xff] %vm2353, %v2344
      %p2355 = scmp.lt.s32.totalorder %s18, 1
      %s2356 = scalar_select %p2355, %s18, 1
      %s2357 = smul.addr %s2356, 9
      %s2358 = smul.addr %s2357, 8
      %s2359 = scalar_lea.vmem %s7, %s2358
      // Predicated region
      $region49: #{up_forward.3} parent=47 // pred_check
        %p2360 = pneg %p193
      $region50: #{up_forward.3} parent=47 // pred_check_branch
        %2362 = sbr.rel (%p2360) target = $region52
      $region51: #{up_forward.3} parent=47 // pred_region
        _
      $region52: #{up_forward.3} parent=47 // pred_fallthru
        _
    $region48: #{up_forward.3} parent=5 // pred_fallthru
      _
    %p2363 = scmp.le.s32.totalorder 2, %s13
    // Predicated region
    $region53: #{up_forward.3} parent=5 // pred_check
      %p2364 = pneg %p2363
    $region54: #{up_forward.3} parent=5 // pred_check_branch
      %2366 = sbr.rel (%p2364) target = $region56
    $region55: #{up_forward.3} parent=5 // pred_region
      %s2367 = ssub.s32 %s13, 2
      // Predicated region
      $region57: #{up_forward.3} parent=55 // pred_check
        %p2368 = pneg %p199
      $region58: #{up_forward.3} parent=55 // pred_check_branch
        %2370 = sbr.rel (%p2368) target = $region60
      $region59: #{up_forward.3} parent=55 // pred_region
        %p2371 = scmp.lt.s32.totalorder %s19, 1
        %s2372 = scalar_select %p2371, %s19, 1
        %s2373 = smul.addr %s2372, 9
        %s2374 = smul.addr %s2373, 8
        %s2375 = scalar_lea.vmem %s7, %s2374
      $region60: #{up_forward.3} parent=55 // pred_fallthru
        _
    $region56: #{up_forward.3} parent=5 // pred_fallthru
      _
  $region6: #{up_forward.3} parent=0 // loop_footer
    %s17 = sadd.s32 1, %s13
  $region7: #{up_forward.3} parent=0 // loop_footer_branch
    %12 = sbr.rel target = $region3
  $region8: #{up_forward.3} parent=0 // loop_exit
    _

</llo_original>
